<compile_context>
chip_gen: v7x
topology: tpu7x:2x2x1
jax: 0.10.0
libtpu: 0.0.40
codegen_flags: <defaults>
</compile_context>

<pallas_src>
import jax
import jax.numpy as jnp
from jax.experimental import pallas as pl
from jax.experimental.pallas import tpu as pltpu

N = 47            # "n" in the PyTorch module
H = W = N + 1     # conv output spatial size (48)
P = N + 2         # halo-padded plane size (49)
NPAIR = N // 2    # 23 full (even, odd) plane pairs; plane 46 handled alone


# ------------------------------- kernel ------------------------------------ #

def fused_net_kernel(x_ref, w_ref, b_ref, c_ref, o_ref):
    # x_ref: SMEM (47,)    f32 -- input vector
    # w_ref: VMEM (24,49,98)   -- lane-packed, halo-padded weight planes:
    #                             w_ref[m, :,  0:49] = plane 2m
    #                             w_ref[m, :, 49:98] = plane 2m+1 (zeros, m=23)
    # b_ref: VMEM (49,49)      -- linear bias as halo-padded image plane
    # c_ref: SMEM (5,)     f32 -- [k00, k01, k10, k11, conv_bias]
    # o_ref: VMEM (1,1,48,48)

    # Linear layer emitted directly in (halo-padded) image layout:
    #   p[i, j] = sum_k x[k] * w3[k, i, j] + b[i, j]
    # The zero halo baked into w3/b makes p the already-zero-padded plane.
    def mac(m, acc):
        pair = w_ref[m]                                    # (49, 98): planes 2m | 2m+1
        return (acc
                + x_ref[2 * m] * pair[:, 0:P]
                + x_ref[2 * m + 1] * pair[:, P:2 * P])

    p = jax.lax.fori_loop(0, NPAIR, mac, b_ref[...], unroll=True)   # planes 0..45
    p = p + x_ref[N - 1] * w_ref[NPAIR, :, 0:P]                     # leftover plane 46

    # 2x2 cross-correlation (stride 1) over the padded plane -> (48, 48).
    out = (c_ref[0] * p[0:H, 0:W]
           + c_ref[1] * p[0:H, 1:W + 1]
           + c_ref[2] * p[1:H + 1, 0:W]
           + c_ref[3] * p[1:H + 1, 1:W + 1]
           + c_ref[4])
    o_ref[...] = out.reshape(1, 1, H, W).astype(o_ref.dtype)


# ------------------------------ wrappers ------------------------------------ #

def prepare_params(lin_w, lin_b, conv_w, conv_b):
    """One-time (init-time) rearrangement of PyTorch-layout params."""
    # lin_w: (n*n, n); y[i*n + j] = sum_k lin_w[i*n + j, k] * x[k]
    # -> planes w3[k, i, j] = lin_w[i*n + j, k], zero-padded 1 px per side.
    w3 = jnp.transpose(lin_w.reshape(N, N, N), (2, 0, 1)).astype(jnp.float32)
    w3 = jnp.pad(w3, ((0, 1), (1, 1), (1, 1)))            # (48, 49, 49); plane 47 == 0
    # Lane-pack pairs of planes: w_packed[m, i, s*49 + j] = w3[2m + s, i, j]
    w_packed = (w3.reshape(NPAIR + 1, 2, P, P)
                  .transpose(0, 2, 1, 3)
                  .reshape(NPAIR + 1, P, 2 * P))          # (24, 49, 98)
    b2 = jnp.pad(lin_b.reshape(N, N).astype(jnp.float32),
                 ((1, 1), (1, 1)))                        # (49, 49)
    cvec = jnp.concatenate(
        [conv_w.reshape(4), conv_b.reshape(1)]).astype(jnp.float32)   # (5,)
    return w_packed, b2, cvec


@jax.jit
def net_forward(x, prepared):
    """x: (1, 47) -> (1, 1, 48, 48), matching Net.forward (batch=1 per spec)."""
    w_packed, b2, cvec = prepared
    return pl.pallas_call(
        fused_net_kernel,
        out_shape=jax.ShapeDtypeStruct((1, 1, H, W), jnp.float32),
        in_specs=[
            pl.BlockSpec(memory_space=pltpu.MemorySpace.SMEM),   # x (flat)
            pl.BlockSpec(memory_space=pltpu.MemorySpace.VMEM),   # packed weight planes
            pl.BlockSpec(memory_space=pltpu.MemorySpace.VMEM),   # bias plane
            pl.BlockSpec(memory_space=pltpu.MemorySpace.SMEM),   # conv taps + bias
        ],
        out_specs=pl.BlockSpec(memory_space=pltpu.MemorySpace.VMEM),
    )(x.reshape(N).astype(jnp.float32), w_packed, b2, cvec)


def init_params(key):
    k1, k2, k3, k4 = jax.random.split(key, 4)
    # nn.Linear(n, n*n): weight (n*n, n), bias (n*n,)
    lin_w = jax.random.normal(k1, (N * N, N), jnp.float32) * 0.05
    lin_b = jax.random.normal(k2, (N * N,), jnp.float32) * 0.05
    # nn.Conv2d(1, 1, (2,2)): weight (1,1,2,2) -> (2,2), bias (1,) -> scalar
    conv_w = jax.random.normal(k3, (2, 2), jnp.float32) * 0.5
    conv_b = jax.random.normal(k4, (), jnp.float32) * 0.5
    return lin_w, lin_b, conv_w, conv_b


def net_forward_ref(x, params):
    """Plain-JAX reference (PyTorch semantics) for a sanity check."""
    lw, lb, cw, cb = params
    y = jnp.dot(x, lw.T, precision=jax.lax.Precision.HIGHEST) + lb
    img = y.reshape(N, N)
    p = jnp.pad(img, ((1, 1), (1, 1)))
    out = (cw[0, 0] * p[0:H, 0:W] + cw[0, 1] * p[0:H, 1:W + 1]
           + cw[1, 0] * p[1:H + 1, 0:W] + cw[1, 1] * p[1:H + 1, 1:W + 1]
           + cb)
    return out.reshape(1, 1, H, W)


if __name__ == "__main__":
    key = jax.random.PRNGKey(0)
    kx, kp = jax.random.split(key)
    x = jax.random.normal(kx, (1, N), jnp.float32)   # batch=1 implied by view(1,1,47,47)
    raw = init_params(kp)
    prepared = prepare_params(*raw)                  # hoisted off the forward path

    out = jax.block_until_ready(net_forward(x, prepared))
    ref = jax.block_until_ready(net_forward_ref(x, raw))

    assert out.shape == (1, 1, H, W), out.shape
    assert jnp.allclose(out, ref, atol=1e-4, rtol=1e-4), "mismatch vs JAX reference"
    print("KERNEL_OK")
</pallas_src>

<mosaic_0001>
module attributes {stable_mosaic.version = 11 : i64} {
  func.func @fused_net_kernel(%arg0: memref<47xf32, #tpu.memory_space<smem>>, %arg1: memref<24x49x98xf32, #tpu.memory_space<vmem>>, %arg2: memref<49x49xf32, #tpu.memory_space<vmem>>, %arg3: memref<5xf32, #tpu.memory_space<smem>>, %arg4: memref<1x1x48x48xf32, #tpu.memory_space<vmem>>) attributes {dimension_semantics = [], scalar_prefetch = 0 : i64, scratch_operands = 0 : i64, tpu.core_type = #tpu.core_type<tc>} {
    %c0 = arith.constant 0 : index
    %c0_0 = arith.constant 0 : index
    %0 = vector.load %arg2[%c0, %c0_0] : memref<49x49xf32, #tpu.memory_space<vmem>>, vector<49x49xf32>
    %c0_i32 = arith.constant 0 : i32
    %1 = arith.index_cast %c0_i32 : i32 to index
    %c0_1 = arith.constant 0 : index
    %c0_2 = arith.constant 0 : index
    %2 = vector.load %arg1[%1, %c0_1, %c0_2] : memref<24x49x98xf32, #tpu.memory_space<vmem>>, vector<1x49x98xf32>
    %3 = vector.shape_cast %2 : vector<1x49x98xf32> to vector<49x98xf32>
    %c2_i32 = arith.constant 2 : i32
    %4 = arith.muli %c2_i32, %c0_i32 : i32
    %5 = arith.index_cast %4 : i32 to index
    %6 = memref.load %arg0[%5] : memref<47xf32, #tpu.memory_space<smem>>
    %7 = vector.extract_strided_slice %3 {offsets = [0, 0], sizes = [49, 49], strides = [1, 1]} : vector<49x98xf32> to vector<49x49xf32>
    %8 = vector.broadcast %6 : f32 to vector<49x49xf32>
    %9 = arith.mulf %8, %7 : vector<49x49xf32>
    %10 = arith.addf %0, %9 : vector<49x49xf32>
    %c2_i32_3 = arith.constant 2 : i32
    %11 = arith.muli %c2_i32_3, %c0_i32 : i32
    %c1_i32 = arith.constant 1 : i32
    %12 = arith.addi %11, %c1_i32 : i32
    %13 = arith.index_cast %12 : i32 to index
    %14 = memref.load %arg0[%13] : memref<47xf32, #tpu.memory_space<smem>>
    %15 = vector.extract_strided_slice %3 {offsets = [0, 49], sizes = [49, 49], strides = [1, 1]} : vector<49x98xf32> to vector<49x49xf32>
    %16 = vector.broadcast %14 : f32 to vector<49x49xf32>
    %17 = arith.mulf %16, %15 : vector<49x49xf32>
    %18 = arith.addf %10, %17 : vector<49x49xf32>
    %c1_i32_4 = arith.constant 1 : i32
    %19 = arith.index_cast %c1_i32_4 : i32 to index
    %c0_5 = arith.constant 0 : index
    %c0_6 = arith.constant 0 : index
    %20 = vector.load %arg1[%19, %c0_5, %c0_6] : memref<24x49x98xf32, #tpu.memory_space<vmem>>, vector<1x49x98xf32>
    %21 = vector.shape_cast %20 : vector<1x49x98xf32> to vector<49x98xf32>
    %c2_i32_7 = arith.constant 2 : i32
    %22 = arith.muli %c2_i32_7, %c1_i32_4 : i32
    %23 = arith.index_cast %22 : i32 to index
    %24 = memref.load %arg0[%23] : memref<47xf32, #tpu.memory_space<smem>>
    %25 = vector.extract_strided_slice %21 {offsets = [0, 0], sizes = [49, 49], strides = [1, 1]} : vector<49x98xf32> to vector<49x49xf32>
    %26 = vector.broadcast %24 : f32 to vector<49x49xf32>
    %27 = arith.mulf %26, %25 : vector<49x49xf32>
    %28 = arith.addf %18, %27 : vector<49x49xf32>
    %c2_i32_8 = arith.constant 2 : i32
    %29 = arith.muli %c2_i32_8, %c1_i32_4 : i32
    %c1_i32_9 = arith.constant 1 : i32
    %30 = arith.addi %29, %c1_i32_9 : i32
    %31 = arith.index_cast %30 : i32 to index
    %32 = memref.load %arg0[%31] : memref<47xf32, #tpu.memory_space<smem>>
    %33 = vector.extract_strided_slice %21 {offsets = [0, 49], sizes = [49, 49], strides = [1, 1]} : vector<49x98xf32> to vector<49x49xf32>
    %34 = vector.broadcast %32 : f32 to vector<49x49xf32>
    %35 = arith.mulf %34, %33 : vector<49x49xf32>
    %36 = arith.addf %28, %35 : vector<49x49xf32>
    %c2_i32_10 = arith.constant 2 : i32
    %37 = arith.index_cast %c2_i32_10 : i32 to index
    %c0_11 = arith.constant 0 : index
    %c0_12 = arith.constant 0 : index
    %38 = vector.load %arg1[%37, %c0_11, %c0_12] : memref<24x49x98xf32, #tpu.memory_space<vmem>>, vector<1x49x98xf32>
    %39 = vector.shape_cast %38 : vector<1x49x98xf32> to vector<49x98xf32>
    %c2_i32_13 = arith.constant 2 : i32
    %40 = arith.muli %c2_i32_13, %c2_i32_10 : i32
    %41 = arith.index_cast %40 : i32 to index
    %42 = memref.load %arg0[%41] : memref<47xf32, #tpu.memory_space<smem>>
    %43 = vector.extract_strided_slice %39 {offsets = [0, 0], sizes = [49, 49], strides = [1, 1]} : vector<49x98xf32> to vector<49x49xf32>
    %44 = vector.broadcast %42 : f32 to vector<49x49xf32>
    %45 = arith.mulf %44, %43 : vector<49x49xf32>
    %46 = arith.addf %36, %45 : vector<49x49xf32>
    %c2_i32_14 = arith.constant 2 : i32
    %47 = arith.muli %c2_i32_14, %c2_i32_10 : i32
    %c1_i32_15 = arith.constant 1 : i32
    %48 = arith.addi %47, %c1_i32_15 : i32
    %49 = arith.index_cast %48 : i32 to index
    %50 = memref.load %arg0[%49] : memref<47xf32, #tpu.memory_space<smem>>
    %51 = vector.extract_strided_slice %39 {offsets = [0, 49], sizes = [49, 49], strides = [1, 1]} : vector<49x98xf32> to vector<49x49xf32>
    %52 = vector.broadcast %50 : f32 to vector<49x49xf32>
    %53 = arith.mulf %52, %51 : vector<49x49xf32>
    %54 = arith.addf %46, %53 : vector<49x49xf32>
    %c3_i32 = arith.constant 3 : i32
    %55 = arith.index_cast %c3_i32 : i32 to index
    %c0_16 = arith.constant 0 : index
    %c0_17 = arith.constant 0 : index
    %56 = vector.load %arg1[%55, %c0_16, %c0_17] : memref<24x49x98xf32, #tpu.memory_space<vmem>>, vector<1x49x98xf32>
    %57 = vector.shape_cast %56 : vector<1x49x98xf32> to vector<49x98xf32>
    %c2_i32_18 = arith.constant 2 : i32
    %58 = arith.muli %c2_i32_18, %c3_i32 : i32
    %59 = arith.index_cast %58 : i32 to index
    %60 = memref.load %arg0[%59] : memref<47xf32, #tpu.memory_space<smem>>
    %61 = vector.extract_strided_slice %57 {offsets = [0, 0], sizes = [49, 49], strides = [1, 1]} : vector<49x98xf32> to vector<49x49xf32>
    %62 = vector.broadcast %60 : f32 to vector<49x49xf32>
    %63 = arith.mulf %62, %61 : vector<49x49xf32>
    %64 = arith.addf %54, %63 : vector<49x49xf32>
    %c2_i32_19 = arith.constant 2 : i32
    %65 = arith.muli %c2_i32_19, %c3_i32 : i32
    %c1_i32_20 = arith.constant 1 : i32
    %66 = arith.addi %65, %c1_i32_20 : i32
    %67 = arith.index_cast %66 : i32 to index
    %68 = memref.load %arg0[%67] : memref<47xf32, #tpu.memory_space<smem>>
    %69 = vector.extract_strided_slice %57 {offsets = [0, 49], sizes = [49, 49], strides = [1, 1]} : vector<49x98xf32> to vector<49x49xf32>
    %70 = vector.broadcast %68 : f32 to vector<49x49xf32>
    %71 = arith.mulf %70, %69 : vector<49x49xf32>
    %72 = arith.addf %64, %71 : vector<49x49xf32>
    %c4_i32 = arith.constant 4 : i32
    %73 = arith.index_cast %c4_i32 : i32 to index
    %c0_21 = arith.constant 0 : index
    %c0_22 = arith.constant 0 : index
    %74 = vector.load %arg1[%73, %c0_21, %c0_22] : memref<24x49x98xf32, #tpu.memory_space<vmem>>, vector<1x49x98xf32>
    %75 = vector.shape_cast %74 : vector<1x49x98xf32> to vector<49x98xf32>
    %c2_i32_23 = arith.constant 2 : i32
    %76 = arith.muli %c2_i32_23, %c4_i32 : i32
    %77 = arith.index_cast %76 : i32 to index
    %78 = memref.load %arg0[%77] : memref<47xf32, #tpu.memory_space<smem>>
    %79 = vector.extract_strided_slice %75 {offsets = [0, 0], sizes = [49, 49], strides = [1, 1]} : vector<49x98xf32> to vector<49x49xf32>
    %80 = vector.broadcast %78 : f32 to vector<49x49xf32>
    %81 = arith.mulf %80, %79 : vector<49x49xf32>
    %82 = arith.addf %72, %81 : vector<49x49xf32>
    %c2_i32_24 = arith.constant 2 : i32
    %83 = arith.muli %c2_i32_24, %c4_i32 : i32
    %c1_i32_25 = arith.constant 1 : i32
    %84 = arith.addi %83, %c1_i32_25 : i32
    %85 = arith.index_cast %84 : i32 to index
    %86 = memref.load %arg0[%85] : memref<47xf32, #tpu.memory_space<smem>>
    %87 = vector.extract_strided_slice %75 {offsets = [0, 49], sizes = [49, 49], strides = [1, 1]} : vector<49x98xf32> to vector<49x49xf32>
    %88 = vector.broadcast %86 : f32 to vector<49x49xf32>
    %89 = arith.mulf %88, %87 : vector<49x49xf32>
    %90 = arith.addf %82, %89 : vector<49x49xf32>
    %c5_i32 = arith.constant 5 : i32
    %91 = arith.index_cast %c5_i32 : i32 to index
    %c0_26 = arith.constant 0 : index
    %c0_27 = arith.constant 0 : index
    %92 = vector.load %arg1[%91, %c0_26, %c0_27] : memref<24x49x98xf32, #tpu.memory_space<vmem>>, vector<1x49x98xf32>
    %93 = vector.shape_cast %92 : vector<1x49x98xf32> to vector<49x98xf32>
    %c2_i32_28 = arith.constant 2 : i32
    %94 = arith.muli %c2_i32_28, %c5_i32 : i32
    %95 = arith.index_cast %94 : i32 to index
    %96 = memref.load %arg0[%95] : memref<47xf32, #tpu.memory_space<smem>>
    %97 = vector.extract_strided_slice %93 {offsets = [0, 0], sizes = [49, 49], strides = [1, 1]} : vector<49x98xf32> to vector<49x49xf32>
    %98 = vector.broadcast %96 : f32 to vector<49x49xf32>
    %99 = arith.mulf %98, %97 : vector<49x49xf32>
    %100 = arith.addf %90, %99 : vector<49x49xf32>
    %c2_i32_29 = arith.constant 2 : i32
    %101 = arith.muli %c2_i32_29, %c5_i32 : i32
    %c1_i32_30 = arith.constant 1 : i32
    %102 = arith.addi %101, %c1_i32_30 : i32
    %103 = arith.index_cast %102 : i32 to index
    %104 = memref.load %arg0[%103] : memref<47xf32, #tpu.memory_space<smem>>
    %105 = vector.extract_strided_slice %93 {offsets = [0, 49], sizes = [49, 49], strides = [1, 1]} : vector<49x98xf32> to vector<49x49xf32>
    %106 = vector.broadcast %104 : f32 to vector<49x49xf32>
    %107 = arith.mulf %106, %105 : vector<49x49xf32>
    %108 = arith.addf %100, %107 : vector<49x49xf32>
    %c6_i32 = arith.constant 6 : i32
    %109 = arith.index_cast %c6_i32 : i32 to index
    %c0_31 = arith.constant 0 : index
    %c0_32 = arith.constant 0 : index
    %110 = vector.load %arg1[%109, %c0_31, %c0_32] : memref<24x49x98xf32, #tpu.memory_space<vmem>>, vector<1x49x98xf32>
    %111 = vector.shape_cast %110 : vector<1x49x98xf32> to vector<49x98xf32>
    %c2_i32_33 = arith.constant 2 : i32
    %112 = arith.muli %c2_i32_33, %c6_i32 : i32
    %113 = arith.index_cast %112 : i32 to index
    %114 = memref.load %arg0[%113] : memref<47xf32, #tpu.memory_space<smem>>
    %115 = vector.extract_strided_slice %111 {offsets = [0, 0], sizes = [49, 49], strides = [1, 1]} : vector<49x98xf32> to vector<49x49xf32>
    %116 = vector.broadcast %114 : f32 to vector<49x49xf32>
    %117 = arith.mulf %116, %115 : vector<49x49xf32>
    %118 = arith.addf %108, %117 : vector<49x49xf32>
    %c2_i32_34 = arith.constant 2 : i32
    %119 = arith.muli %c2_i32_34, %c6_i32 : i32
    %c1_i32_35 = arith.constant 1 : i32
    %120 = arith.addi %119, %c1_i32_35 : i32
    %121 = arith.index_cast %120 : i32 to index
    %122 = memref.load %arg0[%121] : memref<47xf32, #tpu.memory_space<smem>>
    %123 = vector.extract_strided_slice %111 {offsets = [0, 49], sizes = [49, 49], strides = [1, 1]} : vector<49x98xf32> to vector<49x49xf32>
    %124 = vector.broadcast %122 : f32 to vector<49x49xf32>
    %125 = arith.mulf %124, %123 : vector<49x49xf32>
    %126 = arith.addf %118, %125 : vector<49x49xf32>
    %c7_i32 = arith.constant 7 : i32
    %127 = arith.index_cast %c7_i32 : i32 to index
    %c0_36 = arith.constant 0 : index
    %c0_37 = arith.constant 0 : index
    %128 = vector.load %arg1[%127, %c0_36, %c0_37] : memref<24x49x98xf32, #tpu.memory_space<vmem>>, vector<1x49x98xf32>
    %129 = vector.shape_cast %128 : vector<1x49x98xf32> to vector<49x98xf32>
    %c2_i32_38 = arith.constant 2 : i32
    %130 = arith.muli %c2_i32_38, %c7_i32 : i32
    %131 = arith.index_cast %130 : i32 to index
    %132 = memref.load %arg0[%131] : memref<47xf32, #tpu.memory_space<smem>>
    %133 = vector.extract_strided_slice %129 {offsets = [0, 0], sizes = [49, 49], strides = [1, 1]} : vector<49x98xf32> to vector<49x49xf32>
    %134 = vector.broadcast %132 : f32 to vector<49x49xf32>
    %135 = arith.mulf %134, %133 : vector<49x49xf32>
    %136 = arith.addf %126, %135 : vector<49x49xf32>
    %c2_i32_39 = arith.constant 2 : i32
    %137 = arith.muli %c2_i32_39, %c7_i32 : i32
    %c1_i32_40 = arith.constant 1 : i32
    %138 = arith.addi %137, %c1_i32_40 : i32
    %139 = arith.index_cast %138 : i32 to index
    %140 = memref.load %arg0[%139] : memref<47xf32, #tpu.memory_space<smem>>
    %141 = vector.extract_strided_slice %129 {offsets = [0, 49], sizes = [49, 49], strides = [1, 1]} : vector<49x98xf32> to vector<49x49xf32>
    %142 = vector.broadcast %140 : f32 to vector<49x49xf32>
    %143 = arith.mulf %142, %141 : vector<49x49xf32>
    %144 = arith.addf %136, %143 : vector<49x49xf32>
    %c8_i32 = arith.constant 8 : i32
    %145 = arith.index_cast %c8_i32 : i32 to index
    %c0_41 = arith.constant 0 : index
    %c0_42 = arith.constant 0 : index
    %146 = vector.load %arg1[%145, %c0_41, %c0_42] : memref<24x49x98xf32, #tpu.memory_space<vmem>>, vector<1x49x98xf32>
    %147 = vector.shape_cast %146 : vector<1x49x98xf32> to vector<49x98xf32>
    %c2_i32_43 = arith.constant 2 : i32
    %148 = arith.muli %c2_i32_43, %c8_i32 : i32
    %149 = arith.index_cast %148 : i32 to index
    %150 = memref.load %arg0[%149] : memref<47xf32, #tpu.memory_space<smem>>
    %151 = vector.extract_strided_slice %147 {offsets = [0, 0], sizes = [49, 49], strides = [1, 1]} : vector<49x98xf32> to vector<49x49xf32>
    %152 = vector.broadcast %150 : f32 to vector<49x49xf32>
    %153 = arith.mulf %152, %151 : vector<49x49xf32>
    %154 = arith.addf %144, %153 : vector<49x49xf32>
    %c2_i32_44 = arith.constant 2 : i32
    %155 = arith.muli %c2_i32_44, %c8_i32 : i32
    %c1_i32_45 = arith.constant 1 : i32
    %156 = arith.addi %155, %c1_i32_45 : i32
    %157 = arith.index_cast %156 : i32 to index
    %158 = memref.load %arg0[%157] : memref<47xf32, #tpu.memory_space<smem>>
    %159 = vector.extract_strided_slice %147 {offsets = [0, 49], sizes = [49, 49], strides = [1, 1]} : vector<49x98xf32> to vector<49x49xf32>
    %160 = vector.broadcast %158 : f32 to vector<49x49xf32>
    %161 = arith.mulf %160, %159 : vector<49x49xf32>
    %162 = arith.addf %154, %161 : vector<49x49xf32>
    %c9_i32 = arith.constant 9 : i32
    %163 = arith.index_cast %c9_i32 : i32 to index
    %c0_46 = arith.constant 0 : index
    %c0_47 = arith.constant 0 : index
    %164 = vector.load %arg1[%163, %c0_46, %c0_47] : memref<24x49x98xf32, #tpu.memory_space<vmem>>, vector<1x49x98xf32>
    %165 = vector.shape_cast %164 : vector<1x49x98xf32> to vector<49x98xf32>
    %c2_i32_48 = arith.constant 2 : i32
    %166 = arith.muli %c2_i32_48, %c9_i32 : i32
    %167 = arith.index_cast %166 : i32 to index
    %168 = memref.load %arg0[%167] : memref<47xf32, #tpu.memory_space<smem>>
    %169 = vector.extract_strided_slice %165 {offsets = [0, 0], sizes = [49, 49], strides = [1, 1]} : vector<49x98xf32> to vector<49x49xf32>
    %170 = vector.broadcast %168 : f32 to vector<49x49xf32>
    %171 = arith.mulf %170, %169 : vector<49x49xf32>
    %172 = arith.addf %162, %171 : vector<49x49xf32>
    %c2_i32_49 = arith.constant 2 : i32
    %173 = arith.muli %c2_i32_49, %c9_i32 : i32
    %c1_i32_50 = arith.constant 1 : i32
    %174 = arith.addi %173, %c1_i32_50 : i32
    %175 = arith.index_cast %174 : i32 to index
    %176 = memref.load %arg0[%175] : memref<47xf32, #tpu.memory_space<smem>>
    %177 = vector.extract_strided_slice %165 {offsets = [0, 49], sizes = [49, 49], strides = [1, 1]} : vector<49x98xf32> to vector<49x49xf32>
    %178 = vector.broadcast %176 : f32 to vector<49x49xf32>
    %179 = arith.mulf %178, %177 : vector<49x49xf32>
    %180 = arith.addf %172, %179 : vector<49x49xf32>
    %c10_i32 = arith.constant 10 : i32
    %181 = arith.index_cast %c10_i32 : i32 to index
    %c0_51 = arith.constant 0 : index
    %c0_52 = arith.constant 0 : index
    %182 = vector.load %arg1[%181, %c0_51, %c0_52] : memref<24x49x98xf32, #tpu.memory_space<vmem>>, vector<1x49x98xf32>
    %183 = vector.shape_cast %182 : vector<1x49x98xf32> to vector<49x98xf32>
    %c2_i32_53 = arith.constant 2 : i32
    %184 = arith.muli %c2_i32_53, %c10_i32 : i32
    %185 = arith.index_cast %184 : i32 to index
    %186 = memref.load %arg0[%185] : memref<47xf32, #tpu.memory_space<smem>>
    %187 = vector.extract_strided_slice %183 {offsets = [0, 0], sizes = [49, 49], strides = [1, 1]} : vector<49x98xf32> to vector<49x49xf32>
    %188 = vector.broadcast %186 : f32 to vector<49x49xf32>
    %189 = arith.mulf %188, %187 : vector<49x49xf32>
    %190 = arith.addf %180, %189 : vector<49x49xf32>
    %c2_i32_54 = arith.constant 2 : i32
    %191 = arith.muli %c2_i32_54, %c10_i32 : i32
    %c1_i32_55 = arith.constant 1 : i32
    %192 = arith.addi %191, %c1_i32_55 : i32
    %193 = arith.index_cast %192 : i32 to index
    %194 = memref.load %arg0[%193] : memref<47xf32, #tpu.memory_space<smem>>
    %195 = vector.extract_strided_slice %183 {offsets = [0, 49], sizes = [49, 49], strides = [1, 1]} : vector<49x98xf32> to vector<49x49xf32>
    %196 = vector.broadcast %194 : f32 to vector<49x49xf32>
    %197 = arith.mulf %196, %195 : vector<49x49xf32>
    %198 = arith.addf %190, %197 : vector<49x49xf32>
    %c11_i32 = arith.constant 11 : i32
    %199 = arith.index_cast %c11_i32 : i32 to index
    %c0_56 = arith.constant 0 : index
    %c0_57 = arith.constant 0 : index
    %200 = vector.load %arg1[%199, %c0_56, %c0_57] : memref<24x49x98xf32, #tpu.memory_space<vmem>>, vector<1x49x98xf32>
    %201 = vector.shape_cast %200 : vector<1x49x98xf32> to vector<49x98xf32>
    %c2_i32_58 = arith.constant 2 : i32
    %202 = arith.muli %c2_i32_58, %c11_i32 : i32
    %203 = arith.index_cast %202 : i32 to index
    %204 = memref.load %arg0[%203] : memref<47xf32, #tpu.memory_space<smem>>
    %205 = vector.extract_strided_slice %201 {offsets = [0, 0], sizes = [49, 49], strides = [1, 1]} : vector<49x98xf32> to vector<49x49xf32>
    %206 = vector.broadcast %204 : f32 to vector<49x49xf32>
    %207 = arith.mulf %206, %205 : vector<49x49xf32>
    %208 = arith.addf %198, %207 : vector<49x49xf32>
    %c2_i32_59 = arith.constant 2 : i32
    %209 = arith.muli %c2_i32_59, %c11_i32 : i32
    %c1_i32_60 = arith.constant 1 : i32
    %210 = arith.addi %209, %c1_i32_60 : i32
    %211 = arith.index_cast %210 : i32 to index
    %212 = memref.load %arg0[%211] : memref<47xf32, #tpu.memory_space<smem>>
    %213 = vector.extract_strided_slice %201 {offsets = [0, 49], sizes = [49, 49], strides = [1, 1]} : vector<49x98xf32> to vector<49x49xf32>
    %214 = vector.broadcast %212 : f32 to vector<49x49xf32>
    %215 = arith.mulf %214, %213 : vector<49x49xf32>
    %216 = arith.addf %208, %215 : vector<49x49xf32>
    %c12_i32 = arith.constant 12 : i32
    %217 = arith.index_cast %c12_i32 : i32 to index
    %c0_61 = arith.constant 0 : index
    %c0_62 = arith.constant 0 : index
    %218 = vector.load %arg1[%217, %c0_61, %c0_62] : memref<24x49x98xf32, #tpu.memory_space<vmem>>, vector<1x49x98xf32>
    %219 = vector.shape_cast %218 : vector<1x49x98xf32> to vector<49x98xf32>
    %c2_i32_63 = arith.constant 2 : i32
    %220 = arith.muli %c2_i32_63, %c12_i32 : i32
    %221 = arith.index_cast %220 : i32 to index
    %222 = memref.load %arg0[%221] : memref<47xf32, #tpu.memory_space<smem>>
    %223 = vector.extract_strided_slice %219 {offsets = [0, 0], sizes = [49, 49], strides = [1, 1]} : vector<49x98xf32> to vector<49x49xf32>
    %224 = vector.broadcast %222 : f32 to vector<49x49xf32>
    %225 = arith.mulf %224, %223 : vector<49x49xf32>
    %226 = arith.addf %216, %225 : vector<49x49xf32>
    %c2_i32_64 = arith.constant 2 : i32
    %227 = arith.muli %c2_i32_64, %c12_i32 : i32
    %c1_i32_65 = arith.constant 1 : i32
    %228 = arith.addi %227, %c1_i32_65 : i32
    %229 = arith.index_cast %228 : i32 to index
    %230 = memref.load %arg0[%229] : memref<47xf32, #tpu.memory_space<smem>>
    %231 = vector.extract_strided_slice %219 {offsets = [0, 49], sizes = [49, 49], strides = [1, 1]} : vector<49x98xf32> to vector<49x49xf32>
    %232 = vector.broadcast %230 : f32 to vector<49x49xf32>
    %233 = arith.mulf %232, %231 : vector<49x49xf32>
    %234 = arith.addf %226, %233 : vector<49x49xf32>
    %c13_i32 = arith.constant 13 : i32
    %235 = arith.index_cast %c13_i32 : i32 to index
    %c0_66 = arith.constant 0 : index
    %c0_67 = arith.constant 0 : index
    %236 = vector.load %arg1[%235, %c0_66, %c0_67] : memref<24x49x98xf32, #tpu.memory_space<vmem>>, vector<1x49x98xf32>
    %237 = vector.shape_cast %236 : vector<1x49x98xf32> to vector<49x98xf32>
    %c2_i32_68 = arith.constant 2 : i32
    %238 = arith.muli %c2_i32_68, %c13_i32 : i32
    %239 = arith.index_cast %238 : i32 to index
    %240 = memref.load %arg0[%239] : memref<47xf32, #tpu.memory_space<smem>>
    %241 = vector.extract_strided_slice %237 {offsets = [0, 0], sizes = [49, 49], strides = [1, 1]} : vector<49x98xf32> to vector<49x49xf32>
    %242 = vector.broadcast %240 : f32 to vector<49x49xf32>
    %243 = arith.mulf %242, %241 : vector<49x49xf32>
    %244 = arith.addf %234, %243 : vector<49x49xf32>
    %c2_i32_69 = arith.constant 2 : i32
    %245 = arith.muli %c2_i32_69, %c13_i32 : i32
    %c1_i32_70 = arith.constant 1 : i32
    %246 = arith.addi %245, %c1_i32_70 : i32
    %247 = arith.index_cast %246 : i32 to index
    %248 = memref.load %arg0[%247] : memref<47xf32, #tpu.memory_space<smem>>
    %249 = vector.extract_strided_slice %237 {offsets = [0, 49], sizes = [49, 49], strides = [1, 1]} : vector<49x98xf32> to vector<49x49xf32>
    %250 = vector.broadcast %248 : f32 to vector<49x49xf32>
    %251 = arith.mulf %250, %249 : vector<49x49xf32>
    %252 = arith.addf %244, %251 : vector<49x49xf32>
    %c14_i32 = arith.constant 14 : i32
    %253 = arith.index_cast %c14_i32 : i32 to index
    %c0_71 = arith.constant 0 : index
    %c0_72 = arith.constant 0 : index
    %254 = vector.load %arg1[%253, %c0_71, %c0_72] : memref<24x49x98xf32, #tpu.memory_space<vmem>>, vector<1x49x98xf32>
    %255 = vector.shape_cast %254 : vector<1x49x98xf32> to vector<49x98xf32>
    %c2_i32_73 = arith.constant 2 : i32
    %256 = arith.muli %c2_i32_73, %c14_i32 : i32
    %257 = arith.index_cast %256 : i32 to index
    %258 = memref.load %arg0[%257] : memref<47xf32, #tpu.memory_space<smem>>
    %259 = vector.extract_strided_slice %255 {offsets = [0, 0], sizes = [49, 49], strides = [1, 1]} : vector<49x98xf32> to vector<49x49xf32>
    %260 = vector.broadcast %258 : f32 to vector<49x49xf32>
    %261 = arith.mulf %260, %259 : vector<49x49xf32>
    %262 = arith.addf %252, %261 : vector<49x49xf32>
    %c2_i32_74 = arith.constant 2 : i32
    %263 = arith.muli %c2_i32_74, %c14_i32 : i32
    %c1_i32_75 = arith.constant 1 : i32
    %264 = arith.addi %263, %c1_i32_75 : i32
    %265 = arith.index_cast %264 : i32 to index
    %266 = memref.load %arg0[%265] : memref<47xf32, #tpu.memory_space<smem>>
    %267 = vector.extract_strided_slice %255 {offsets = [0, 49], sizes = [49, 49], strides = [1, 1]} : vector<49x98xf32> to vector<49x49xf32>
    %268 = vector.broadcast %266 : f32 to vector<49x49xf32>
    %269 = arith.mulf %268, %267 : vector<49x49xf32>
    %270 = arith.addf %262, %269 : vector<49x49xf32>
    %c15_i32 = arith.constant 15 : i32
    %271 = arith.index_cast %c15_i32 : i32 to index
    %c0_76 = arith.constant 0 : index
    %c0_77 = arith.constant 0 : index
    %272 = vector.load %arg1[%271, %c0_76, %c0_77] : memref<24x49x98xf32, #tpu.memory_space<vmem>>, vector<1x49x98xf32>
    %273 = vector.shape_cast %272 : vector<1x49x98xf32> to vector<49x98xf32>
    %c2_i32_78 = arith.constant 2 : i32
    %274 = arith.muli %c2_i32_78, %c15_i32 : i32
    %275 = arith.index_cast %274 : i32 to index
    %276 = memref.load %arg0[%275] : memref<47xf32, #tpu.memory_space<smem>>
    %277 = vector.extract_strided_slice %273 {offsets = [0, 0], sizes = [49, 49], strides = [1, 1]} : vector<49x98xf32> to vector<49x49xf32>
    %278 = vector.broadcast %276 : f32 to vector<49x49xf32>
    %279 = arith.mulf %278, %277 : vector<49x49xf32>
    %280 = arith.addf %270, %279 : vector<49x49xf32>
    %c2_i32_79 = arith.constant 2 : i32
    %281 = arith.muli %c2_i32_79, %c15_i32 : i32
    %c1_i32_80 = arith.constant 1 : i32
    %282 = arith.addi %281, %c1_i32_80 : i32
    %283 = arith.index_cast %282 : i32 to index
    %284 = memref.load %arg0[%283] : memref<47xf32, #tpu.memory_space<smem>>
    %285 = vector.extract_strided_slice %273 {offsets = [0, 49], sizes = [49, 49], strides = [1, 1]} : vector<49x98xf32> to vector<49x49xf32>
    %286 = vector.broadcast %284 : f32 to vector<49x49xf32>
    %287 = arith.mulf %286, %285 : vector<49x49xf32>
    %288 = arith.addf %280, %287 : vector<49x49xf32>
    %c16_i32 = arith.constant 16 : i32
    %289 = arith.index_cast %c16_i32 : i32 to index
    %c0_81 = arith.constant 0 : index
    %c0_82 = arith.constant 0 : index
    %290 = vector.load %arg1[%289, %c0_81, %c0_82] : memref<24x49x98xf32, #tpu.memory_space<vmem>>, vector<1x49x98xf32>
    %291 = vector.shape_cast %290 : vector<1x49x98xf32> to vector<49x98xf32>
    %c2_i32_83 = arith.constant 2 : i32
    %292 = arith.muli %c2_i32_83, %c16_i32 : i32
    %293 = arith.index_cast %292 : i32 to index
    %294 = memref.load %arg0[%293] : memref<47xf32, #tpu.memory_space<smem>>
    %295 = vector.extract_strided_slice %291 {offsets = [0, 0], sizes = [49, 49], strides = [1, 1]} : vector<49x98xf32> to vector<49x49xf32>
    %296 = vector.broadcast %294 : f32 to vector<49x49xf32>
    %297 = arith.mulf %296, %295 : vector<49x49xf32>
    %298 = arith.addf %288, %297 : vector<49x49xf32>
    %c2_i32_84 = arith.constant 2 : i32
    %299 = arith.muli %c2_i32_84, %c16_i32 : i32
    %c1_i32_85 = arith.constant 1 : i32
    %300 = arith.addi %299, %c1_i32_85 : i32
    %301 = arith.index_cast %300 : i32 to index
    %302 = memref.load %arg0[%301] : memref<47xf32, #tpu.memory_space<smem>>
    %303 = vector.extract_strided_slice %291 {offsets = [0, 49], sizes = [49, 49], strides = [1, 1]} : vector<49x98xf32> to vector<49x49xf32>
    %304 = vector.broadcast %302 : f32 to vector<49x49xf32>
    %305 = arith.mulf %304, %303 : vector<49x49xf32>
    %306 = arith.addf %298, %305 : vector<49x49xf32>
    %c17_i32 = arith.constant 17 : i32
    %307 = arith.index_cast %c17_i32 : i32 to index
    %c0_86 = arith.constant 0 : index
    %c0_87 = arith.constant 0 : index
    %308 = vector.load %arg1[%307, %c0_86, %c0_87] : memref<24x49x98xf32, #tpu.memory_space<vmem>>, vector<1x49x98xf32>
    %309 = vector.shape_cast %308 : vector<1x49x98xf32> to vector<49x98xf32>
    %c2_i32_88 = arith.constant 2 : i32
    %310 = arith.muli %c2_i32_88, %c17_i32 : i32
    %311 = arith.index_cast %310 : i32 to index
    %312 = memref.load %arg0[%311] : memref<47xf32, #tpu.memory_space<smem>>
    %313 = vector.extract_strided_slice %309 {offsets = [0, 0], sizes = [49, 49], strides = [1, 1]} : vector<49x98xf32> to vector<49x49xf32>
    %314 = vector.broadcast %312 : f32 to vector<49x49xf32>
    %315 = arith.mulf %314, %313 : vector<49x49xf32>
    %316 = arith.addf %306, %315 : vector<49x49xf32>
    %c2_i32_89 = arith.constant 2 : i32
    %317 = arith.muli %c2_i32_89, %c17_i32 : i32
    %c1_i32_90 = arith.constant 1 : i32
    %318 = arith.addi %317, %c1_i32_90 : i32
    %319 = arith.index_cast %318 : i32 to index
    %320 = memref.load %arg0[%319] : memref<47xf32, #tpu.memory_space<smem>>
    %321 = vector.extract_strided_slice %309 {offsets = [0, 49], sizes = [49, 49], strides = [1, 1]} : vector<49x98xf32> to vector<49x49xf32>
    %322 = vector.broadcast %320 : f32 to vector<49x49xf32>
    %323 = arith.mulf %322, %321 : vector<49x49xf32>
    %324 = arith.addf %316, %323 : vector<49x49xf32>
    %c18_i32 = arith.constant 18 : i32
    %325 = arith.index_cast %c18_i32 : i32 to index
    %c0_91 = arith.constant 0 : index
    %c0_92 = arith.constant 0 : index
    %326 = vector.load %arg1[%325, %c0_91, %c0_92] : memref<24x49x98xf32, #tpu.memory_space<vmem>>, vector<1x49x98xf32>
    %327 = vector.shape_cast %326 : vector<1x49x98xf32> to vector<49x98xf32>
    %c2_i32_93 = arith.constant 2 : i32
    %328 = arith.muli %c2_i32_93, %c18_i32 : i32
    %329 = arith.index_cast %328 : i32 to index
    %330 = memref.load %arg0[%329] : memref<47xf32, #tpu.memory_space<smem>>
    %331 = vector.extract_strided_slice %327 {offsets = [0, 0], sizes = [49, 49], strides = [1, 1]} : vector<49x98xf32> to vector<49x49xf32>
    %332 = vector.broadcast %330 : f32 to vector<49x49xf32>
    %333 = arith.mulf %332, %331 : vector<49x49xf32>
    %334 = arith.addf %324, %333 : vector<49x49xf32>
    %c2_i32_94 = arith.constant 2 : i32
    %335 = arith.muli %c2_i32_94, %c18_i32 : i32
    %c1_i32_95 = arith.constant 1 : i32
    %336 = arith.addi %335, %c1_i32_95 : i32
    %337 = arith.index_cast %336 : i32 to index
    %338 = memref.load %arg0[%337] : memref<47xf32, #tpu.memory_space<smem>>
    %339 = vector.extract_strided_slice %327 {offsets = [0, 49], sizes = [49, 49], strides = [1, 1]} : vector<49x98xf32> to vector<49x49xf32>
    %340 = vector.broadcast %338 : f32 to vector<49x49xf32>
    %341 = arith.mulf %340, %339 : vector<49x49xf32>
    %342 = arith.addf %334, %341 : vector<49x49xf32>
    %c19_i32 = arith.constant 19 : i32
    %343 = arith.index_cast %c19_i32 : i32 to index
    %c0_96 = arith.constant 0 : index
    %c0_97 = arith.constant 0 : index
    %344 = vector.load %arg1[%343, %c0_96, %c0_97] : memref<24x49x98xf32, #tpu.memory_space<vmem>>, vector<1x49x98xf32>
    %345 = vector.shape_cast %344 : vector<1x49x98xf32> to vector<49x98xf32>
    %c2_i32_98 = arith.constant 2 : i32
    %346 = arith.muli %c2_i32_98, %c19_i32 : i32
    %347 = arith.index_cast %346 : i32 to index
    %348 = memref.load %arg0[%347] : memref<47xf32, #tpu.memory_space<smem>>
    %349 = vector.extract_strided_slice %345 {offsets = [0, 0], sizes = [49, 49], strides = [1, 1]} : vector<49x98xf32> to vector<49x49xf32>
    %350 = vector.broadcast %348 : f32 to vector<49x49xf32>
    %351 = arith.mulf %350, %349 : vector<49x49xf32>
    %352 = arith.addf %342, %351 : vector<49x49xf32>
    %c2_i32_99 = arith.constant 2 : i32
    %353 = arith.muli %c2_i32_99, %c19_i32 : i32
    %c1_i32_100 = arith.constant 1 : i32
    %354 = arith.addi %353, %c1_i32_100 : i32
    %355 = arith.index_cast %354 : i32 to index
    %356 = memref.load %arg0[%355] : memref<47xf32, #tpu.memory_space<smem>>
    %357 = vector.extract_strided_slice %345 {offsets = [0, 49], sizes = [49, 49], strides = [1, 1]} : vector<49x98xf32> to vector<49x49xf32>
    %358 = vector.broadcast %356 : f32 to vector<49x49xf32>
    %359 = arith.mulf %358, %357 : vector<49x49xf32>
    %360 = arith.addf %352, %359 : vector<49x49xf32>
    %c20_i32 = arith.constant 20 : i32
    %361 = arith.index_cast %c20_i32 : i32 to index
    %c0_101 = arith.constant 0 : index
    %c0_102 = arith.constant 0 : index
    %362 = vector.load %arg1[%361, %c0_101, %c0_102] : memref<24x49x98xf32, #tpu.memory_space<vmem>>, vector<1x49x98xf32>
    %363 = vector.shape_cast %362 : vector<1x49x98xf32> to vector<49x98xf32>
    %c2_i32_103 = arith.constant 2 : i32
    %364 = arith.muli %c2_i32_103, %c20_i32 : i32
    %365 = arith.index_cast %364 : i32 to index
    %366 = memref.load %arg0[%365] : memref<47xf32, #tpu.memory_space<smem>>
    %367 = vector.extract_strided_slice %363 {offsets = [0, 0], sizes = [49, 49], strides = [1, 1]} : vector<49x98xf32> to vector<49x49xf32>
    %368 = vector.broadcast %366 : f32 to vector<49x49xf32>
    %369 = arith.mulf %368, %367 : vector<49x49xf32>
    %370 = arith.addf %360, %369 : vector<49x49xf32>
    %c2_i32_104 = arith.constant 2 : i32
    %371 = arith.muli %c2_i32_104, %c20_i32 : i32
    %c1_i32_105 = arith.constant 1 : i32
    %372 = arith.addi %371, %c1_i32_105 : i32
    %373 = arith.index_cast %372 : i32 to index
    %374 = memref.load %arg0[%373] : memref<47xf32, #tpu.memory_space<smem>>
    %375 = vector.extract_strided_slice %363 {offsets = [0, 49], sizes = [49, 49], strides = [1, 1]} : vector<49x98xf32> to vector<49x49xf32>
    %376 = vector.broadcast %374 : f32 to vector<49x49xf32>
    %377 = arith.mulf %376, %375 : vector<49x49xf32>
    %378 = arith.addf %370, %377 : vector<49x49xf32>
    %c21_i32 = arith.constant 21 : i32
    %379 = arith.index_cast %c21_i32 : i32 to index
    %c0_106 = arith.constant 0 : index
    %c0_107 = arith.constant 0 : index
    %380 = vector.load %arg1[%379, %c0_106, %c0_107] : memref<24x49x98xf32, #tpu.memory_space<vmem>>, vector<1x49x98xf32>
    %381 = vector.shape_cast %380 : vector<1x49x98xf32> to vector<49x98xf32>
    %c2_i32_108 = arith.constant 2 : i32
    %382 = arith.muli %c2_i32_108, %c21_i32 : i32
    %383 = arith.index_cast %382 : i32 to index
    %384 = memref.load %arg0[%383] : memref<47xf32, #tpu.memory_space<smem>>
    %385 = vector.extract_strided_slice %381 {offsets = [0, 0], sizes = [49, 49], strides = [1, 1]} : vector<49x98xf32> to vector<49x49xf32>
    %386 = vector.broadcast %384 : f32 to vector<49x49xf32>
    %387 = arith.mulf %386, %385 : vector<49x49xf32>
    %388 = arith.addf %378, %387 : vector<49x49xf32>
    %c2_i32_109 = arith.constant 2 : i32
    %389 = arith.muli %c2_i32_109, %c21_i32 : i32
    %c1_i32_110 = arith.constant 1 : i32
    %390 = arith.addi %389, %c1_i32_110 : i32
    %391 = arith.index_cast %390 : i32 to index
    %392 = memref.load %arg0[%391] : memref<47xf32, #tpu.memory_space<smem>>
    %393 = vector.extract_strided_slice %381 {offsets = [0, 49], sizes = [49, 49], strides = [1, 1]} : vector<49x98xf32> to vector<49x49xf32>
    %394 = vector.broadcast %392 : f32 to vector<49x49xf32>
    %395 = arith.mulf %394, %393 : vector<49x49xf32>
    %396 = arith.addf %388, %395 : vector<49x49xf32>
    %c22_i32 = arith.constant 22 : i32
    %397 = arith.index_cast %c22_i32 : i32 to index
    %c0_111 = arith.constant 0 : index
    %c0_112 = arith.constant 0 : index
    %398 = vector.load %arg1[%397, %c0_111, %c0_112] : memref<24x49x98xf32, #tpu.memory_space<vmem>>, vector<1x49x98xf32>
    %399 = vector.shape_cast %398 : vector<1x49x98xf32> to vector<49x98xf32>
    %c2_i32_113 = arith.constant 2 : i32
    %400 = arith.muli %c2_i32_113, %c22_i32 : i32
    %401 = arith.index_cast %400 : i32 to index
    %402 = memref.load %arg0[%401] : memref<47xf32, #tpu.memory_space<smem>>
    %403 = vector.extract_strided_slice %399 {offsets = [0, 0], sizes = [49, 49], strides = [1, 1]} : vector<49x98xf32> to vector<49x49xf32>
    %404 = vector.broadcast %402 : f32 to vector<49x49xf32>
    %405 = arith.mulf %404, %403 : vector<49x49xf32>
    %406 = arith.addf %396, %405 : vector<49x49xf32>
    %c2_i32_114 = arith.constant 2 : i32
    %407 = arith.muli %c2_i32_114, %c22_i32 : i32
    %c1_i32_115 = arith.constant 1 : i32
    %408 = arith.addi %407, %c1_i32_115 : i32
    %409 = arith.index_cast %408 : i32 to index
    %410 = memref.load %arg0[%409] : memref<47xf32, #tpu.memory_space<smem>>
    %411 = vector.extract_strided_slice %399 {offsets = [0, 49], sizes = [49, 49], strides = [1, 1]} : vector<49x98xf32> to vector<49x49xf32>
    %412 = vector.broadcast %410 : f32 to vector<49x49xf32>
    %413 = arith.mulf %412, %411 : vector<49x49xf32>
    %414 = arith.addf %406, %413 : vector<49x49xf32>
    %c23_i32 = arith.constant 23 : i32
    %c46 = arith.constant 46 : index
    %415 = memref.load %arg0[%c46] : memref<47xf32, #tpu.memory_space<smem>>
    %c23 = arith.constant 23 : index
    %c0_116 = arith.constant 0 : index
    %c0_117 = arith.constant 0 : index
    %416 = vector.load %arg1[%c23, %c0_116, %c0_117] : memref<24x49x98xf32, #tpu.memory_space<vmem>>, vector<1x49x49xf32>
    %417 = vector.shape_cast %416 : vector<1x49x49xf32> to vector<49x49xf32>
    %418 = vector.broadcast %415 : f32 to vector<49x49xf32>
    %419 = arith.mulf %418, %417 : vector<49x49xf32>
    %420 = arith.addf %414, %419 : vector<49x49xf32>
    %c0_118 = arith.constant 0 : index
    %421 = memref.load %arg3[%c0_118] : memref<5xf32, #tpu.memory_space<smem>>
    %422 = vector.extract_strided_slice %420 {offsets = [0, 0], sizes = [48, 48], strides = [1, 1]} : vector<49x49xf32> to vector<48x48xf32>
    %423 = vector.broadcast %421 : f32 to vector<48x48xf32>
    %424 = arith.mulf %423, %422 : vector<48x48xf32>
    %c1 = arith.constant 1 : index
    %425 = memref.load %arg3[%c1] : memref<5xf32, #tpu.memory_space<smem>>
    %426 = vector.extract_strided_slice %420 {offsets = [0, 1], sizes = [48, 48], strides = [1, 1]} : vector<49x49xf32> to vector<48x48xf32>
    %427 = vector.broadcast %425 : f32 to vector<48x48xf32>
    %428 = arith.mulf %427, %426 : vector<48x48xf32>
    %429 = arith.addf %424, %428 : vector<48x48xf32>
    %c2 = arith.constant 2 : index
    %430 = memref.load %arg3[%c2] : memref<5xf32, #tpu.memory_space<smem>>
    %431 = vector.extract_strided_slice %420 {offsets = [1, 0], sizes = [48, 48], strides = [1, 1]} : vector<49x49xf32> to vector<48x48xf32>
    %432 = vector.broadcast %430 : f32 to vector<48x48xf32>
    %433 = arith.mulf %432, %431 : vector<48x48xf32>
    %434 = arith.addf %429, %433 : vector<48x48xf32>
    %c3 = arith.constant 3 : index
    %435 = memref.load %arg3[%c3] : memref<5xf32, #tpu.memory_space<smem>>
    %436 = vector.extract_strided_slice %420 {offsets = [1, 1], sizes = [48, 48], strides = [1, 1]} : vector<49x49xf32> to vector<48x48xf32>
    %437 = vector.broadcast %435 : f32 to vector<48x48xf32>
    %438 = arith.mulf %437, %436 : vector<48x48xf32>
    %439 = arith.addf %434, %438 : vector<48x48xf32>
    %c4 = arith.constant 4 : index
    %440 = memref.load %arg3[%c4] : memref<5xf32, #tpu.memory_space<smem>>
    %441 = vector.broadcast %440 : f32 to vector<48x48xf32>
    %442 = arith.addf %439, %441 : vector<48x48xf32>
    %443 = vector.shape_cast %442 : vector<48x48xf32> to vector<1x1x48x48xf32>
    %c0_119 = arith.constant 0 : index
    %c0_120 = arith.constant 0 : index
    %c0_121 = arith.constant 0 : index
    %c0_122 = arith.constant 0 : index
    %444 = vector.load %arg4[%c0_119, %c0_120, %c0_121, %c0_122] : memref<1x1x48x48xf32, #tpu.memory_space<vmem>>, vector<1x1x48x48xf32>
    tpu.vector_store %arg4[%c0_119, %c0_120, %c0_121, %c0_122], %443 {strides = array<i32>} : memref<1x1x48x48xf32, #tpu.memory_space<vmem>>, vector<1x1x48x48xf32>,
    return
  }
}

</mosaic_0001>

<llo_original>
// kernel: net_forward.1
$region0: #{net_forward.1}
  #allocation0 [shape = 'u32[]', space=smem, size = 0x4, offset = 0x4, fixed_abs, tag = 'smem constant byte address 0x4 - core index']
  #allocation1 [shape = 'u32[144,128]{1,0:T(1,128)}', space=vmem, size = 0x12000, scoped, tag = 'internal scratch']
  %s0 = inlined_call_operand.vmem [shape: f32[47], index: 0, kind: input, shape index: {}]
  %s1 = inlined_call_operand.vmem [shape: f32[24,49,98], index: 1, kind: input, shape index: {}]
  %s2 = inlined_call_operand.vmem [shape: f32[49,49], index: 2, kind: input, shape index: {}]
  %s3 = inlined_call_operand.vmem [shape: f32[5], index: 3, kind: input, shape index: {}]
  %s4 = inlined_call_operand.hbm [shape: f32[1,1,48,48], index: 4, kind: output, shape index: {}]
  %s5 = sld [smem:[#allocation0]]
  $region34: #{net_forward.1} parent=0
    _
  %s7 = ssub.s32 1, %s5
  %s8 = scalar_select 0, %s7, %s5
  $region1: #{net_forward.1} parent=0
    #allocation2 [shape = 'u8[512]{0}', space=smem, size = 0x200, scoped, tag = 'input window, operand 0, single buffered']
    #allocation3 [shape = 's32[1]{0}', space=sflag, size = 0x4, scoped, tag = 'scoped memory for net_forward.1']
    #allocation4 [shape = 's32[1]{0}', space=sflag, size = 0x4, scoped, tag = 'scoped memory for net_forward.1']
    #allocation5 [shape = 'u8[512]{0}', space=smem, size = 0x200, scoped, tag = 'input window, operand 3, single buffered']
    #allocation6 [shape = 's32[1]{0}', space=sflag, size = 0x4, scoped, tag = 'scoped memory for net_forward.1']
    #allocation7 [shape = 'u8[24576]{0}', space=vmem, size = 0x6000, scoped, tag = 'output window, operand 0, single buffered']
    %9 = vsyncpa [#allocation4], 0
    %10 = vsyncpa [#allocation6], 0
    %11 = vsyncpa [#allocation3], 0
    // Predicated region
    $region2: #{net_forward.1} parent=1 // pred_check
      _
    $region3: #{net_forward.1} parent=1 // pred_check_branch
      %13 = sbr.rel (0) target = $region5
    $region4: #{net_forward.1} parent=1 // pred_region
      %s15 = ssub.s32 16, 16
      %16 = vsyncadd [#allocation4], %s15
      %s18 = sshll.u32 %s0, 4
      %s19 = int_to_ptr.vmem [resolvable:$true] %s18
      %21 = dma.vmem_to_smem %s19, 16, [#allocation2], [#allocation4]
    $region5: #{net_forward.1} parent=1 // pred_fallthru
      _
    // Predicated region
    $region6: #{net_forward.1} parent=1 // pred_check
      _
    $region7: #{net_forward.1} parent=1 // pred_check_branch
      %23 = sbr.rel (0) target = $region9
    $region8: #{net_forward.1} parent=1 // pred_region
      _
    $region9: #{net_forward.1} parent=1 // pred_fallthru
      _
    // Predicated region
    $region10: #{net_forward.1} parent=1 // pred_check
      _
    $region11: #{net_forward.1} parent=1 // pred_check_branch
      %25 = sbr.rel (0) target = $region13
    $region12: #{net_forward.1} parent=1 // pred_region
      _
    $region13: #{net_forward.1} parent=1 // pred_fallthru
      _
    // Predicated region
    $region14: #{net_forward.1} parent=1 // pred_check
      _
    $region15: #{net_forward.1} parent=1 // pred_check_branch
      %27 = sbr.rel (0) target = $region17
    $region16: #{net_forward.1} parent=1 // pred_region
      %s29 = ssub.s32 16, 16
      %30 = vsyncadd [#allocation6], %s29
      %s32 = sshll.u32 %s3, 4
      %s33 = int_to_ptr.vmem [resolvable:$true] %s32
      %35 = dma.vmem_to_smem %s33, 16, [#allocation5], [#allocation6]
    $region17: #{net_forward.1} parent=1 // pred_fallthru
      _
    // Predicated region
    $region18: #{net_forward.1} parent=1 // pred_check
      _
    $region19: #{net_forward.1} parent=1 // pred_check_branch
      %37 = sbr.rel (0) target = $region21
    $region20: #{net_forward.1} parent=1 // pred_region
      %38 = dma.done [#allocation4], 16
    $region21: #{net_forward.1} parent=1 // pred_fallthru
      _
    // Predicated region
    $region22: #{net_forward.1} parent=1 // pred_check
      _
    $region23: #{net_forward.1} parent=1 // pred_check_branch
      %40 = sbr.rel (0) target = $region25
    $region24: #{net_forward.1} parent=1 // pred_region
      %41 = dma.done [#allocation6], 16
    $region25: #{net_forward.1} parent=1 // pred_fallthru
      _
    %42 = sfence
    %v43 = vld [vmem:[%s2] sm:$0xff]
    %v44 = vld [vmem:[%s2 + $0x8] sm:$0xff]
    %v45 = vld [vmem:[%s2 + $0x10] sm:$0xff]
    %v46 = vld [vmem:[%s2 + $0x18] sm:$0xff]
    %v47 = vld [vmem:[%s2 + $0x20] sm:$0xff]
    %v48 = vld [vmem:[%s2 + $0x28] sm:$0xff]
    %v49 = vld [vmem:[%s2 + $0x30] sm:$0x1]
    %v50 = vld [vmem:[%s1] sm:$0xff]
    %v51 = vld [vmem:[%s1 + $0x8] sm:$0xff]
    %v52 = vld [vmem:[%s1 + $0x10] sm:$0xff]
    %v53 = vld [vmem:[%s1 + $0x18] sm:$0xff]
    %v54 = vld [vmem:[%s1 + $0x20] sm:$0xff]
    %v55 = vld [vmem:[%s1 + $0x28] sm:$0xff]
    %v56 = vld [vmem:[%s1 + $0x30] sm:$0x1]
    %s57 = sld [smem:[#allocation2]]
    %v58 = vstv %s57
    %v59 = vmul.f32 %v58, %v50
    %v60 = vmul.f32 %v58, %v51
    %v61 = vmul.f32 %v58, %v52
    %v62 = vmul.f32 %v58, %v53
    %v63 = vmul.f32 %v58, %v54
    %v64 = vmul.f32 %v58, %v55
    %v65 = vmul.f32 %v58, %v56
    %v66 = vadd.f32 %v43, %v59
    %v67 = vadd.f32 %v44, %v60
    %v68 = vadd.f32 %v45, %v61
    %v69 = vadd.f32 %v46, %v62
    %v70 = vadd.f32 %v47, %v63
    %v71 = vadd.f32 %v48, %v64
    %v72 = vadd.f32 %v49, %v65
    %s73 = sld [smem:[#allocation2 + $0x1]]
    %v74 = vstv %s73
    %v75 = vmul.f32 %v74, %v50
    %v76 = vmul.f32 %v74, %v51
    %v77 = vmul.f32 %v74, %v52
    %v78 = vmul.f32 %v74, %v53
    %v79 = vmul.f32 %v74, %v54
    %v80 = vmul.f32 %v74, %v55
    %v81 = vmul.f32 %v74, %v56
    %89 = vrot.lane.b32.xlu0 %v75, 79
    %v90 = vpop.permute.xlu0 %89
    %91 = vrot.lane.b32.xlu0 %v76, 79
    %v92 = vpop.permute.xlu0 %91
    %93 = vrot.lane.b32.xlu0 %v77, 79
    %v94 = vpop.permute.xlu0 %93
    %95 = vrot.lane.b32.xlu0 %v78, 79
    %v96 = vpop.permute.xlu0 %95
    %97 = vrot.lane.b32.xlu0 %v79, 79
    %v98 = vpop.permute.xlu0 %97
    %99 = vrot.lane.b32.xlu0 %v80, 79
    %v100 = vpop.permute.xlu0 %99
    %101 = vrot.lane.b32.xlu0 %v81, 79
    %v102 = vpop.permute.xlu0 %101
    %v110 = vadd.f32 %v66, %v90
    %v111 = vadd.f32 %v67, %v92
    %v112 = vadd.f32 %v68, %v94
    %v113 = vadd.f32 %v69, %v96
    %v114 = vadd.f32 %v70, %v98
    %v115 = vadd.f32 %v71, %v100
    %v116 = vadd.f32 %v72, %v102
    %s117 = scalar_lea.vmem %s1, 56
    %v118 = vld [vmem:[%s117] sm:$0xff]
    %v119 = vld [vmem:[%s117 + $0x8] sm:$0xff]
    %v120 = vld [vmem:[%s117 + $0x10] sm:$0xff]
    %v121 = vld [vmem:[%s117 + $0x18] sm:$0xff]
    %v122 = vld [vmem:[%s117 + $0x20] sm:$0xff]
    %v123 = vld [vmem:[%s117 + $0x28] sm:$0xff]
    %v124 = vld [vmem:[%s117 + $0x30] sm:$0x1]
    %s125 = sld [smem:[#allocation2 + $0x2]]
    %v126 = vstv %s125
    %v127 = vmul.f32 %v126, %v118
    %v128 = vmul.f32 %v126, %v119
    %v129 = vmul.f32 %v126, %v120
    %v130 = vmul.f32 %v126, %v121
    %v131 = vmul.f32 %v126, %v122
    %v132 = vmul.f32 %v126, %v123
    %v133 = vmul.f32 %v126, %v124
    %v134 = vadd.f32 %v110, %v127
    %v135 = vadd.f32 %v111, %v128
    %v136 = vadd.f32 %v112, %v129
    %v137 = vadd.f32 %v113, %v130
    %v138 = vadd.f32 %v114, %v131
    %v139 = vadd.f32 %v115, %v132
    %v140 = vadd.f32 %v116, %v133
    %s141 = sld [smem:[#allocation2 + $0x3]]
    %v142 = vstv %s141
    %v143 = vmul.f32 %v142, %v118
    %v144 = vmul.f32 %v142, %v119
    %v145 = vmul.f32 %v142, %v120
    %v146 = vmul.f32 %v142, %v121
    %v147 = vmul.f32 %v142, %v122
    %v148 = vmul.f32 %v142, %v123
    %v149 = vmul.f32 %v142, %v124
    %157 = vrot.lane.b32.xlu0 %v143, 79
    %v158 = vpop.permute.xlu0 %157
    %159 = vrot.lane.b32.xlu0 %v144, 79
    %v160 = vpop.permute.xlu0 %159
    %161 = vrot.lane.b32.xlu0 %v145, 79
    %v162 = vpop.permute.xlu0 %161
    %163 = vrot.lane.b32.xlu0 %v146, 79
    %v164 = vpop.permute.xlu0 %163
    %165 = vrot.lane.b32.xlu0 %v147, 79
    %v166 = vpop.permute.xlu0 %165
    %167 = vrot.lane.b32.xlu0 %v148, 79
    %v168 = vpop.permute.xlu0 %167
    %169 = vrot.lane.b32.xlu0 %v149, 79
    %v170 = vpop.permute.xlu0 %169
    %v178 = vadd.f32 %v134, %v158
    %v179 = vadd.f32 %v135, %v160
    %v180 = vadd.f32 %v136, %v162
    %v181 = vadd.f32 %v137, %v164
    %v182 = vadd.f32 %v138, %v166
    %v183 = vadd.f32 %v139, %v168
    %v184 = vadd.f32 %v140, %v170
    %s185 = scalar_lea.vmem %s1, 112
    %v186 = vld [vmem:[%s185] sm:$0xff]
    %v187 = vld [vmem:[%s185 + $0x8] sm:$0xff]
    %v188 = vld [vmem:[%s185 + $0x10] sm:$0xff]
    %v189 = vld [vmem:[%s185 + $0x18] sm:$0xff]
    %v190 = vld [vmem:[%s185 + $0x20] sm:$0xff]
    %v191 = vld [vmem:[%s185 + $0x28] sm:$0xff]
    %v192 = vld [vmem:[%s185 + $0x30] sm:$0x1]
    %s193 = sld [smem:[#allocation2 + $0x4]]
    %v194 = vstv %s193
    %v195 = vmul.f32 %v194, %v186
    %v196 = vmul.f32 %v194, %v187
    %v197 = vmul.f32 %v194, %v188
    %v198 = vmul.f32 %v194, %v189
    %v199 = vmul.f32 %v194, %v190
    %v200 = vmul.f32 %v194, %v191
    %v201 = vmul.f32 %v194, %v192
    %v202 = vadd.f32 %v178, %v195
    %v203 = vadd.f32 %v179, %v196
    %v204 = vadd.f32 %v180, %v197
    %v205 = vadd.f32 %v181, %v198
    %v206 = vadd.f32 %v182, %v199
    %v207 = vadd.f32 %v183, %v200
    %v208 = vadd.f32 %v184, %v201
    %s209 = sld [smem:[#allocation2 + $0x5]]
    %v210 = vstv %s209
    %v211 = vmul.f32 %v210, %v186
    %v212 = vmul.f32 %v210, %v187
    %v213 = vmul.f32 %v210, %v188
    %v214 = vmul.f32 %v210, %v189
    %v215 = vmul.f32 %v210, %v190
    %v216 = vmul.f32 %v210, %v191
    %v217 = vmul.f32 %v210, %v192
    %225 = vrot.lane.b32.xlu0 %v211, 79
    %v226 = vpop.permute.xlu0 %225
    %227 = vrot.lane.b32.xlu0 %v212, 79
    %v228 = vpop.permute.xlu0 %227
    %229 = vrot.lane.b32.xlu0 %v213, 79
    %v230 = vpop.permute.xlu0 %229
    %231 = vrot.lane.b32.xlu0 %v214, 79
    %v232 = vpop.permute.xlu0 %231
    %233 = vrot.lane.b32.xlu0 %v215, 79
    %v234 = vpop.permute.xlu0 %233
    %235 = vrot.lane.b32.xlu0 %v216, 79
    %v236 = vpop.permute.xlu0 %235
    %237 = vrot.lane.b32.xlu0 %v217, 79
    %v238 = vpop.permute.xlu0 %237
    %v246 = vadd.f32 %v202, %v226
    %v247 = vadd.f32 %v203, %v228
    %v248 = vadd.f32 %v204, %v230
    %v249 = vadd.f32 %v205, %v232
    %v250 = vadd.f32 %v206, %v234
    %v251 = vadd.f32 %v207, %v236
    %v252 = vadd.f32 %v208, %v238
    %s253 = scalar_lea.vmem %s1, 168
    %v254 = vld [vmem:[%s253] sm:$0xff]
    %v255 = vld [vmem:[%s253 + $0x8] sm:$0xff]
    %v256 = vld [vmem:[%s253 + $0x10] sm:$0xff]
    %v257 = vld [vmem:[%s253 + $0x18] sm:$0xff]
    %v258 = vld [vmem:[%s253 + $0x20] sm:$0xff]
    %v259 = vld [vmem:[%s253 + $0x28] sm:$0xff]
    %v260 = vld [vmem:[%s253 + $0x30] sm:$0x1]
    %s261 = sld [smem:[#allocation2 + $0x6]]
    %v262 = vstv %s261
    %v263 = vmul.f32 %v262, %v254
    %v264 = vmul.f32 %v262, %v255
    %v265 = vmul.f32 %v262, %v256
    %v266 = vmul.f32 %v262, %v257
    %v267 = vmul.f32 %v262, %v258
    %v268 = vmul.f32 %v262, %v259
    %v269 = vmul.f32 %v262, %v260
    %v270 = vadd.f32 %v246, %v263
    %v271 = vadd.f32 %v247, %v264
    %v272 = vadd.f32 %v248, %v265
    %v273 = vadd.f32 %v249, %v266
    %v274 = vadd.f32 %v250, %v267
    %v275 = vadd.f32 %v251, %v268
    %v276 = vadd.f32 %v252, %v269
    %s277 = sld [smem:[#allocation2 + $0x7]]
    %v278 = vstv %s277
    %v279 = vmul.f32 %v278, %v254
    %v280 = vmul.f32 %v278, %v255
    %v281 = vmul.f32 %v278, %v256
    %v282 = vmul.f32 %v278, %v257
    %v283 = vmul.f32 %v278, %v258
    %v284 = vmul.f32 %v278, %v259
    %v285 = vmul.f32 %v278, %v260
    %293 = vrot.lane.b32.xlu0 %v279, 79
    %v294 = vpop.permute.xlu0 %293
    %295 = vrot.lane.b32.xlu0 %v280, 79
    %v296 = vpop.permute.xlu0 %295
    %297 = vrot.lane.b32.xlu0 %v281, 79
    %v298 = vpop.permute.xlu0 %297
    %299 = vrot.lane.b32.xlu0 %v282, 79
    %v300 = vpop.permute.xlu0 %299
    %301 = vrot.lane.b32.xlu0 %v283, 79
    %v302 = vpop.permute.xlu0 %301
    %303 = vrot.lane.b32.xlu0 %v284, 79
    %v304 = vpop.permute.xlu0 %303
    %305 = vrot.lane.b32.xlu0 %v285, 79
    %v306 = vpop.permute.xlu0 %305
    %v314 = vadd.f32 %v270, %v294
    %v315 = vadd.f32 %v271, %v296
    %v316 = vadd.f32 %v272, %v298
    %v317 = vadd.f32 %v273, %v300
    %v318 = vadd.f32 %v274, %v302
    %v319 = vadd.f32 %v275, %v304
    %v320 = vadd.f32 %v276, %v306
    %s321 = scalar_lea.vmem %s1, 224
    %v322 = vld [vmem:[%s321] sm:$0xff]
    %v323 = vld [vmem:[%s321 + $0x8] sm:$0xff]
    %v324 = vld [vmem:[%s321 + $0x10] sm:$0xff]
    %v325 = vld [vmem:[%s321 + $0x18] sm:$0xff]
    %v326 = vld [vmem:[%s321 + $0x20] sm:$0xff]
    %v327 = vld [vmem:[%s321 + $0x28] sm:$0xff]
    %v328 = vld [vmem:[%s321 + $0x30] sm:$0x1]
    %s329 = sld [smem:[#allocation2 + $0x8]]
    %v330 = vstv %s329
    %v331 = vmul.f32 %v330, %v322
    %v332 = vmul.f32 %v330, %v323
    %v333 = vmul.f32 %v330, %v324
    %v334 = vmul.f32 %v330, %v325
    %v335 = vmul.f32 %v330, %v326
    %v336 = vmul.f32 %v330, %v327
    %v337 = vmul.f32 %v330, %v328
    %v338 = vadd.f32 %v314, %v331
    %v339 = vadd.f32 %v315, %v332
    %v340 = vadd.f32 %v316, %v333
    %v341 = vadd.f32 %v317, %v334
    %v342 = vadd.f32 %v318, %v335
    %v343 = vadd.f32 %v319, %v336
    %v344 = vadd.f32 %v320, %v337
    %s345 = sld [smem:[#allocation2 + $0x9]]
    %v346 = vstv %s345
    %v347 = vmul.f32 %v346, %v322
    %v348 = vmul.f32 %v346, %v323
    %v349 = vmul.f32 %v346, %v324
    %v350 = vmul.f32 %v346, %v325
    %v351 = vmul.f32 %v346, %v326
    %v352 = vmul.f32 %v346, %v327
    %v353 = vmul.f32 %v346, %v328
    %361 = vrot.lane.b32.xlu0 %v347, 79
    %v362 = vpop.permute.xlu0 %361
    %363 = vrot.lane.b32.xlu0 %v348, 79
    %v364 = vpop.permute.xlu0 %363
    %365 = vrot.lane.b32.xlu0 %v349, 79
    %v366 = vpop.permute.xlu0 %365
    %367 = vrot.lane.b32.xlu0 %v350, 79
    %v368 = vpop.permute.xlu0 %367
    %369 = vrot.lane.b32.xlu0 %v351, 79
    %v370 = vpop.permute.xlu0 %369
    %371 = vrot.lane.b32.xlu0 %v352, 79
    %v372 = vpop.permute.xlu0 %371
    %373 = vrot.lane.b32.xlu0 %v353, 79
    %v374 = vpop.permute.xlu0 %373
    %v382 = vadd.f32 %v338, %v362
    %v383 = vadd.f32 %v339, %v364
    %v384 = vadd.f32 %v340, %v366
    %v385 = vadd.f32 %v341, %v368
    %v386 = vadd.f32 %v342, %v370
    %v387 = vadd.f32 %v343, %v372
    %v388 = vadd.f32 %v344, %v374
    %s389 = scalar_lea.vmem %s1, 280
    %v390 = vld [vmem:[%s389] sm:$0xff]
    %v391 = vld [vmem:[%s389 + $0x8] sm:$0xff]
    %v392 = vld [vmem:[%s389 + $0x10] sm:$0xff]
    %v393 = vld [vmem:[%s389 + $0x18] sm:$0xff]
    %v394 = vld [vmem:[%s389 + $0x20] sm:$0xff]
    %v395 = vld [vmem:[%s389 + $0x28] sm:$0xff]
    %v396 = vld [vmem:[%s389 + $0x30] sm:$0x1]
    %s397 = sld [smem:[#allocation2 + $0xa]]
    %v398 = vstv %s397
    %v399 = vmul.f32 %v398, %v390
    %v400 = vmul.f32 %v398, %v391
    %v401 = vmul.f32 %v398, %v392
    %v402 = vmul.f32 %v398, %v393
    %v403 = vmul.f32 %v398, %v394
    %v404 = vmul.f32 %v398, %v395
    %v405 = vmul.f32 %v398, %v396
    %v406 = vadd.f32 %v382, %v399
    %v407 = vadd.f32 %v383, %v400
    %v408 = vadd.f32 %v384, %v401
    %v409 = vadd.f32 %v385, %v402
    %v410 = vadd.f32 %v386, %v403
    %v411 = vadd.f32 %v387, %v404
    %v412 = vadd.f32 %v388, %v405
    %s413 = sld [smem:[#allocation2 + $0xb]]
    %v414 = vstv %s413
    %v415 = vmul.f32 %v414, %v390
    %v416 = vmul.f32 %v414, %v391
    %v417 = vmul.f32 %v414, %v392
    %v418 = vmul.f32 %v414, %v393
    %v419 = vmul.f32 %v414, %v394
    %v420 = vmul.f32 %v414, %v395
    %v421 = vmul.f32 %v414, %v396
    %429 = vrot.lane.b32.xlu0 %v415, 79
    %v430 = vpop.permute.xlu0 %429
    %431 = vrot.lane.b32.xlu0 %v416, 79
    %v432 = vpop.permute.xlu0 %431
    %433 = vrot.lane.b32.xlu0 %v417, 79
    %v434 = vpop.permute.xlu0 %433
    %435 = vrot.lane.b32.xlu0 %v418, 79
    %v436 = vpop.permute.xlu0 %435
    %437 = vrot.lane.b32.xlu0 %v419, 79
    %v438 = vpop.permute.xlu0 %437
    %439 = vrot.lane.b32.xlu0 %v420, 79
    %v440 = vpop.permute.xlu0 %439
    %441 = vrot.lane.b32.xlu0 %v421, 79
    %v442 = vpop.permute.xlu0 %441
    %v450 = vadd.f32 %v406, %v430
    %v451 = vadd.f32 %v407, %v432
    %v452 = vadd.f32 %v408, %v434
    %v453 = vadd.f32 %v409, %v436
    %v454 = vadd.f32 %v410, %v438
    %v455 = vadd.f32 %v411, %v440
    %v456 = vadd.f32 %v412, %v442
    %s457 = scalar_lea.vmem %s1, 336
    %v458 = vld [vmem:[%s457] sm:$0xff]
    %v459 = vld [vmem:[%s457 + $0x8] sm:$0xff]
    %v460 = vld [vmem:[%s457 + $0x10] sm:$0xff]
    %v461 = vld [vmem:[%s457 + $0x18] sm:$0xff]
    %v462 = vld [vmem:[%s457 + $0x20] sm:$0xff]
    %v463 = vld [vmem:[%s457 + $0x28] sm:$0xff]
    %v464 = vld [vmem:[%s457 + $0x30] sm:$0x1]
    %s465 = sld [smem:[#allocation2 + $0xc]]
    %v466 = vstv %s465
    %v467 = vmul.f32 %v466, %v458
    %v468 = vmul.f32 %v466, %v459
    %v469 = vmul.f32 %v466, %v460
    %v470 = vmul.f32 %v466, %v461
    %v471 = vmul.f32 %v466, %v462
    %v472 = vmul.f32 %v466, %v463
    %v473 = vmul.f32 %v466, %v464
    %v474 = vadd.f32 %v450, %v467
    %v475 = vadd.f32 %v451, %v468
    %v476 = vadd.f32 %v452, %v469
    %v477 = vadd.f32 %v453, %v470
    %v478 = vadd.f32 %v454, %v471
    %v479 = vadd.f32 %v455, %v472
    %v480 = vadd.f32 %v456, %v473
    %s481 = sld [smem:[#allocation2 + $0xd]]
    %v482 = vstv %s481
    %v483 = vmul.f32 %v482, %v458
    %v484 = vmul.f32 %v482, %v459
    %v485 = vmul.f32 %v482, %v460
    %v486 = vmul.f32 %v482, %v461
    %v487 = vmul.f32 %v482, %v462
    %v488 = vmul.f32 %v482, %v463
    %v489 = vmul.f32 %v482, %v464
    %497 = vrot.lane.b32.xlu0 %v483, 79
    %v498 = vpop.permute.xlu0 %497
    %499 = vrot.lane.b32.xlu0 %v484, 79
    %v500 = vpop.permute.xlu0 %499
    %501 = vrot.lane.b32.xlu0 %v485, 79
    %v502 = vpop.permute.xlu0 %501
    %503 = vrot.lane.b32.xlu0 %v486, 79
    %v504 = vpop.permute.xlu0 %503
    %505 = vrot.lane.b32.xlu0 %v487, 79
    %v506 = vpop.permute.xlu0 %505
    %507 = vrot.lane.b32.xlu0 %v488, 79
    %v508 = vpop.permute.xlu0 %507
    %509 = vrot.lane.b32.xlu0 %v489, 79
    %v510 = vpop.permute.xlu0 %509
    %v518 = vadd.f32 %v474, %v498
    %v519 = vadd.f32 %v475, %v500
    %v520 = vadd.f32 %v476, %v502
    %v521 = vadd.f32 %v477, %v504
    %v522 = vadd.f32 %v478, %v506
    %v523 = vadd.f32 %v479, %v508
    %v524 = vadd.f32 %v480, %v510
    %s525 = scalar_lea.vmem %s1, 392
    %v526 = vld [vmem:[%s525] sm:$0xff]
    %v527 = vld [vmem:[%s525 + $0x8] sm:$0xff]
    %v528 = vld [vmem:[%s525 + $0x10] sm:$0xff]
    %v529 = vld [vmem:[%s525 + $0x18] sm:$0xff]
    %v530 = vld [vmem:[%s525 + $0x20] sm:$0xff]
    %v531 = vld [vmem:[%s525 + $0x28] sm:$0xff]
    %v532 = vld [vmem:[%s525 + $0x30] sm:$0x1]
    %s533 = sld [smem:[#allocation2 + $0xe]]
    %v534 = vstv %s533
    %v535 = vmul.f32 %v534, %v526
    %v536 = vmul.f32 %v534, %v527
    %v537 = vmul.f32 %v534, %v528
    %v538 = vmul.f32 %v534, %v529
    %v539 = vmul.f32 %v534, %v530
    %v540 = vmul.f32 %v534, %v531
    %v541 = vmul.f32 %v534, %v532
    %v542 = vadd.f32 %v518, %v535
    %v543 = vadd.f32 %v519, %v536
    %v544 = vadd.f32 %v520, %v537
    %v545 = vadd.f32 %v521, %v538
    %v546 = vadd.f32 %v522, %v539
    %v547 = vadd.f32 %v523, %v540
    %v548 = vadd.f32 %v524, %v541
    %s549 = sld [smem:[#allocation2 + $0xf]]
    %v550 = vstv %s549
    %v551 = vmul.f32 %v550, %v526
    %v552 = vmul.f32 %v550, %v527
    %v553 = vmul.f32 %v550, %v528
    %v554 = vmul.f32 %v550, %v529
    %v555 = vmul.f32 %v550, %v530
    %v556 = vmul.f32 %v550, %v531
    %v557 = vmul.f32 %v550, %v532
    %565 = vrot.lane.b32.xlu0 %v551, 79
    %v566 = vpop.permute.xlu0 %565
    %567 = vrot.lane.b32.xlu0 %v552, 79
    %v568 = vpop.permute.xlu0 %567
    %569 = vrot.lane.b32.xlu0 %v553, 79
    %v570 = vpop.permute.xlu0 %569
    %571 = vrot.lane.b32.xlu0 %v554, 79
    %v572 = vpop.permute.xlu0 %571
    %573 = vrot.lane.b32.xlu0 %v555, 79
    %v574 = vpop.permute.xlu0 %573
    %575 = vrot.lane.b32.xlu0 %v556, 79
    %v576 = vpop.permute.xlu0 %575
    %577 = vrot.lane.b32.xlu0 %v557, 79
    %v578 = vpop.permute.xlu0 %577
    %v586 = vadd.f32 %v542, %v566
    %v587 = vadd.f32 %v543, %v568
    %v588 = vadd.f32 %v544, %v570
    %v589 = vadd.f32 %v545, %v572
    %v590 = vadd.f32 %v546, %v574
    %v591 = vadd.f32 %v547, %v576
    %v592 = vadd.f32 %v548, %v578
    %s593 = scalar_lea.vmem %s1, 448
    %v594 = vld [vmem:[%s593] sm:$0xff]
    %v595 = vld [vmem:[%s593 + $0x8] sm:$0xff]
    %v596 = vld [vmem:[%s593 + $0x10] sm:$0xff]
    %v597 = vld [vmem:[%s593 + $0x18] sm:$0xff]
    %v598 = vld [vmem:[%s593 + $0x20] sm:$0xff]
    %v599 = vld [vmem:[%s593 + $0x28] sm:$0xff]
    %v600 = vld [vmem:[%s593 + $0x30] sm:$0x1]
    %s601 = sld [smem:[#allocation2 + $0x10]]
    %v602 = vstv %s601
    %v603 = vmul.f32 %v602, %v594
    %v604 = vmul.f32 %v602, %v595
    %v605 = vmul.f32 %v602, %v596
    %v606 = vmul.f32 %v602, %v597
    %v607 = vmul.f32 %v602, %v598
    %v608 = vmul.f32 %v602, %v599
    %v609 = vmul.f32 %v602, %v600
    %v610 = vadd.f32 %v586, %v603
    %v611 = vadd.f32 %v587, %v604
    %v612 = vadd.f32 %v588, %v605
    %v613 = vadd.f32 %v589, %v606
    %v614 = vadd.f32 %v590, %v607
    %v615 = vadd.f32 %v591, %v608
    %v616 = vadd.f32 %v592, %v609
    %s617 = sld [smem:[#allocation2 + $0x11]]
    %v618 = vstv %s617
    %v619 = vmul.f32 %v618, %v594
    %v620 = vmul.f32 %v618, %v595
    %v621 = vmul.f32 %v618, %v596
    %v622 = vmul.f32 %v618, %v597
    %v623 = vmul.f32 %v618, %v598
    %v624 = vmul.f32 %v618, %v599
    %v625 = vmul.f32 %v618, %v600
    %633 = vrot.lane.b32.xlu0 %v619, 79
    %v634 = vpop.permute.xlu0 %633
    %635 = vrot.lane.b32.xlu0 %v620, 79
    %v636 = vpop.permute.xlu0 %635
    %637 = vrot.lane.b32.xlu0 %v621, 79
    %v638 = vpop.permute.xlu0 %637
    %639 = vrot.lane.b32.xlu0 %v622, 79
    %v640 = vpop.permute.xlu0 %639
    %641 = vrot.lane.b32.xlu0 %v623, 79
    %v642 = vpop.permute.xlu0 %641
    %643 = vrot.lane.b32.xlu0 %v624, 79
    %v644 = vpop.permute.xlu0 %643
    %645 = vrot.lane.b32.xlu0 %v625, 79
    %v646 = vpop.permute.xlu0 %645
    %v654 = vadd.f32 %v610, %v634
    %v655 = vadd.f32 %v611, %v636
    %v656 = vadd.f32 %v612, %v638
    %v657 = vadd.f32 %v613, %v640
    %v658 = vadd.f32 %v614, %v642
    %v659 = vadd.f32 %v615, %v644
    %v660 = vadd.f32 %v616, %v646
    %s661 = scalar_lea.vmem %s1, 504
    %v662 = vld [vmem:[%s661] sm:$0xff]
    %v663 = vld [vmem:[%s661 + $0x8] sm:$0xff]
    %v664 = vld [vmem:[%s661 + $0x10] sm:$0xff]
    %v665 = vld [vmem:[%s661 + $0x18] sm:$0xff]
    %v666 = vld [vmem:[%s661 + $0x20] sm:$0xff]
    %v667 = vld [vmem:[%s661 + $0x28] sm:$0xff]
    %v668 = vld [vmem:[%s661 + $0x30] sm:$0x1]
    %s669 = sld [smem:[#allocation2 + $0x12]]
    %v670 = vstv %s669
    %v671 = vmul.f32 %v670, %v662
    %v672 = vmul.f32 %v670, %v663
    %v673 = vmul.f32 %v670, %v664
    %v674 = vmul.f32 %v670, %v665
    %v675 = vmul.f32 %v670, %v666
    %v676 = vmul.f32 %v670, %v667
    %v677 = vmul.f32 %v670, %v668
    %v678 = vadd.f32 %v654, %v671
    %v679 = vadd.f32 %v655, %v672
    %v680 = vadd.f32 %v656, %v673
    %v681 = vadd.f32 %v657, %v674
    %v682 = vadd.f32 %v658, %v675
    %v683 = vadd.f32 %v659, %v676
    %v684 = vadd.f32 %v660, %v677
    %s685 = sld [smem:[#allocation2 + $0x13]]
    %v686 = vstv %s685
    %v687 = vmul.f32 %v686, %v662
    %v688 = vmul.f32 %v686, %v663
    %v689 = vmul.f32 %v686, %v664
    %v690 = vmul.f32 %v686, %v665
    %v691 = vmul.f32 %v686, %v666
    %v692 = vmul.f32 %v686, %v667
    %v693 = vmul.f32 %v686, %v668
    %701 = vrot.lane.b32.xlu0 %v687, 79
    %v702 = vpop.permute.xlu0 %701
    %703 = vrot.lane.b32.xlu0 %v688, 79
    %v704 = vpop.permute.xlu0 %703
    %705 = vrot.lane.b32.xlu0 %v689, 79
    %v706 = vpop.permute.xlu0 %705
    %707 = vrot.lane.b32.xlu0 %v690, 79
    %v708 = vpop.permute.xlu0 %707
    %709 = vrot.lane.b32.xlu0 %v691, 79
    %v710 = vpop.permute.xlu0 %709
    %711 = vrot.lane.b32.xlu0 %v692, 79
    %v712 = vpop.permute.xlu0 %711
    %713 = vrot.lane.b32.xlu0 %v693, 79
    %v714 = vpop.permute.xlu0 %713
    %v722 = vadd.f32 %v678, %v702
    %v723 = vadd.f32 %v679, %v704
    %v724 = vadd.f32 %v680, %v706
    %v725 = vadd.f32 %v681, %v708
    %v726 = vadd.f32 %v682, %v710
    %v727 = vadd.f32 %v683, %v712
    %v728 = vadd.f32 %v684, %v714
    %s729 = scalar_lea.vmem %s1, 560
    %v730 = vld [vmem:[%s729] sm:$0xff]
    %v731 = vld [vmem:[%s729 + $0x8] sm:$0xff]
    %v732 = vld [vmem:[%s729 + $0x10] sm:$0xff]
    %v733 = vld [vmem:[%s729 + $0x18] sm:$0xff]
    %v734 = vld [vmem:[%s729 + $0x20] sm:$0xff]
    %v735 = vld [vmem:[%s729 + $0x28] sm:$0xff]
    %v736 = vld [vmem:[%s729 + $0x30] sm:$0x1]
    %s737 = sld [smem:[#allocation2 + $0x14]]
    %v738 = vstv %s737
    %v739 = vmul.f32 %v738, %v730
    %v740 = vmul.f32 %v738, %v731
    %v741 = vmul.f32 %v738, %v732
    %v742 = vmul.f32 %v738, %v733
    %v743 = vmul.f32 %v738, %v734
    %v744 = vmul.f32 %v738, %v735
    %v745 = vmul.f32 %v738, %v736
    %v746 = vadd.f32 %v722, %v739
    %v747 = vadd.f32 %v723, %v740
    %v748 = vadd.f32 %v724, %v741
    %v749 = vadd.f32 %v725, %v742
    %v750 = vadd.f32 %v726, %v743
    %v751 = vadd.f32 %v727, %v744
    %v752 = vadd.f32 %v728, %v745
    %s753 = sld [smem:[#allocation2 + $0x15]]
    %v754 = vstv %s753
    %v755 = vmul.f32 %v754, %v730
    %v756 = vmul.f32 %v754, %v731
    %v757 = vmul.f32 %v754, %v732
    %v758 = vmul.f32 %v754, %v733
    %v759 = vmul.f32 %v754, %v734
    %v760 = vmul.f32 %v754, %v735
    %v761 = vmul.f32 %v754, %v736
    %769 = vrot.lane.b32.xlu0 %v755, 79
    %v770 = vpop.permute.xlu0 %769
    %771 = vrot.lane.b32.xlu0 %v756, 79
    %v772 = vpop.permute.xlu0 %771
    %773 = vrot.lane.b32.xlu0 %v757, 79
    %v774 = vpop.permute.xlu0 %773
    %775 = vrot.lane.b32.xlu0 %v758, 79
    %v776 = vpop.permute.xlu0 %775
    %777 = vrot.lane.b32.xlu0 %v759, 79
    %v778 = vpop.permute.xlu0 %777
    %779 = vrot.lane.b32.xlu0 %v760, 79
    %v780 = vpop.permute.xlu0 %779
    %781 = vrot.lane.b32.xlu0 %v761, 79
    %v782 = vpop.permute.xlu0 %781
    %v790 = vadd.f32 %v746, %v770
    %v791 = vadd.f32 %v747, %v772
    %v792 = vadd.f32 %v748, %v774
    %v793 = vadd.f32 %v749, %v776
    %v794 = vadd.f32 %v750, %v778
    %v795 = vadd.f32 %v751, %v780
    %v796 = vadd.f32 %v752, %v782
    %s797 = scalar_lea.vmem %s1, 616
    %v798 = vld [vmem:[%s797] sm:$0xff]
    %v799 = vld [vmem:[%s797 + $0x8] sm:$0xff]
    %v800 = vld [vmem:[%s797 + $0x10] sm:$0xff]
    %v801 = vld [vmem:[%s797 + $0x18] sm:$0xff]
    %v802 = vld [vmem:[%s797 + $0x20] sm:$0xff]
    %v803 = vld [vmem:[%s797 + $0x28] sm:$0xff]
    %v804 = vld [vmem:[%s797 + $0x30] sm:$0x1]
    %s805 = sld [smem:[#allocation2 + $0x16]]
    %v806 = vstv %s805
    %v807 = vmul.f32 %v806, %v798
    %v808 = vmul.f32 %v806, %v799
    %v809 = vmul.f32 %v806, %v800
    %v810 = vmul.f32 %v806, %v801
    %v811 = vmul.f32 %v806, %v802
    %v812 = vmul.f32 %v806, %v803
    %v813 = vmul.f32 %v806, %v804
    %v814 = vadd.f32 %v790, %v807
    %v815 = vadd.f32 %v791, %v808
    %v816 = vadd.f32 %v792, %v809
    %v817 = vadd.f32 %v793, %v810
    %v818 = vadd.f32 %v794, %v811
    %v819 = vadd.f32 %v795, %v812
    %v820 = vadd.f32 %v796, %v813
    %s821 = sld [smem:[#allocation2 + $0x17]]
    %v822 = vstv %s821
    %v823 = vmul.f32 %v822, %v798
    %v824 = vmul.f32 %v822, %v799
    %v825 = vmul.f32 %v822, %v800
    %v826 = vmul.f32 %v822, %v801
    %v827 = vmul.f32 %v822, %v802
    %v828 = vmul.f32 %v822, %v803
    %v829 = vmul.f32 %v822, %v804
    %837 = vrot.lane.b32.xlu0 %v823, 79
    %v838 = vpop.permute.xlu0 %837
    %839 = vrot.lane.b32.xlu0 %v824, 79
    %v840 = vpop.permute.xlu0 %839
    %841 = vrot.lane.b32.xlu0 %v825, 79
    %v842 = vpop.permute.xlu0 %841
    %843 = vrot.lane.b32.xlu0 %v826, 79
    %v844 = vpop.permute.xlu0 %843
    %845 = vrot.lane.b32.xlu0 %v827, 79
    %v846 = vpop.permute.xlu0 %845
    %847 = vrot.lane.b32.xlu0 %v828, 79
    %v848 = vpop.permute.xlu0 %847
    %849 = vrot.lane.b32.xlu0 %v829, 79
    %v850 = vpop.permute.xlu0 %849
    %v858 = vadd.f32 %v814, %v838
    %v859 = vadd.f32 %v815, %v840
    %v860 = vadd.f32 %v816, %v842
    %v861 = vadd.f32 %v817, %v844
    %v862 = vadd.f32 %v818, %v846
    %v863 = vadd.f32 %v819, %v848
    %v864 = vadd.f32 %v820, %v850
    %s865 = scalar_lea.vmem %s1, 672
    %v866 = vld [vmem:[%s865] sm:$0xff]
    %v867 = vld [vmem:[%s865 + $0x8] sm:$0xff]
    %v868 = vld [vmem:[%s865 + $0x10] sm:$0xff]
    %v869 = vld [vmem:[%s865 + $0x18] sm:$0xff]
    %v870 = vld [vmem:[%s865 + $0x20] sm:$0xff]
    %v871 = vld [vmem:[%s865 + $0x28] sm:$0xff]
    %v872 = vld [vmem:[%s865 + $0x30] sm:$0x1]
    %s873 = sld [smem:[#allocation2 + $0x18]]
    %v874 = vstv %s873
    %v875 = vmul.f32 %v874, %v866
    %v876 = vmul.f32 %v874, %v867
    %v877 = vmul.f32 %v874, %v868
    %v878 = vmul.f32 %v874, %v869
    %v879 = vmul.f32 %v874, %v870
    %v880 = vmul.f32 %v874, %v871
    %v881 = vmul.f32 %v874, %v872
    %v882 = vadd.f32 %v858, %v875
    %v883 = vadd.f32 %v859, %v876
    %v884 = vadd.f32 %v860, %v877
    %v885 = vadd.f32 %v861, %v878
    %v886 = vadd.f32 %v862, %v879
    %v887 = vadd.f32 %v863, %v880
    %v888 = vadd.f32 %v864, %v881
    %s889 = sld [smem:[#allocation2 + $0x19]]
    %v890 = vstv %s889
    %v891 = vmul.f32 %v890, %v866
    %v892 = vmul.f32 %v890, %v867
    %v893 = vmul.f32 %v890, %v868
    %v894 = vmul.f32 %v890, %v869
    %v895 = vmul.f32 %v890, %v870
    %v896 = vmul.f32 %v890, %v871
    %v897 = vmul.f32 %v890, %v872
    %905 = vrot.lane.b32.xlu0 %v891, 79
    %v906 = vpop.permute.xlu0 %905
    %907 = vrot.lane.b32.xlu0 %v892, 79
    %v908 = vpop.permute.xlu0 %907
    %909 = vrot.lane.b32.xlu0 %v893, 79
    %v910 = vpop.permute.xlu0 %909
    %911 = vrot.lane.b32.xlu0 %v894, 79
    %v912 = vpop.permute.xlu0 %911
    %913 = vrot.lane.b32.xlu0 %v895, 79
    %v914 = vpop.permute.xlu0 %913
    %915 = vrot.lane.b32.xlu0 %v896, 79
    %v916 = vpop.permute.xlu0 %915
    %917 = vrot.lane.b32.xlu0 %v897, 79
    %v918 = vpop.permute.xlu0 %917
    %v926 = vadd.f32 %v882, %v906
    %v927 = vadd.f32 %v883, %v908
    %v928 = vadd.f32 %v884, %v910
    %v929 = vadd.f32 %v885, %v912
    %v930 = vadd.f32 %v886, %v914
    %v931 = vadd.f32 %v887, %v916
    %v932 = vadd.f32 %v888, %v918
    %s933 = scalar_lea.vmem %s1, 728
    %v934 = vld [vmem:[%s933] sm:$0xff]
    %v935 = vld [vmem:[%s933 + $0x8] sm:$0xff]
    %v936 = vld [vmem:[%s933 + $0x10] sm:$0xff]
    %v937 = vld [vmem:[%s933 + $0x18] sm:$0xff]
    %v938 = vld [vmem:[%s933 + $0x20] sm:$0xff]
    %v939 = vld [vmem:[%s933 + $0x28] sm:$0xff]
    %v940 = vld [vmem:[%s933 + $0x30] sm:$0x1]
    %s941 = sld [smem:[#allocation2 + $0x1a]]
    %v942 = vstv %s941
    %v943 = vmul.f32 %v942, %v934
    %v944 = vmul.f32 %v942, %v935
    %v945 = vmul.f32 %v942, %v936
    %v946 = vmul.f32 %v942, %v937
    %v947 = vmul.f32 %v942, %v938
    %v948 = vmul.f32 %v942, %v939
    %v949 = vmul.f32 %v942, %v940
    %v950 = vadd.f32 %v926, %v943
    %v951 = vadd.f32 %v927, %v944
    %v952 = vadd.f32 %v928, %v945
    %v953 = vadd.f32 %v929, %v946
    %v954 = vadd.f32 %v930, %v947
    %v955 = vadd.f32 %v931, %v948
    %v956 = vadd.f32 %v932, %v949
    %s957 = sld [smem:[#allocation2 + $0x1b]]
    %v958 = vstv %s957
    %v959 = vmul.f32 %v958, %v934
    %v960 = vmul.f32 %v958, %v935
    %v961 = vmul.f32 %v958, %v936
    %v962 = vmul.f32 %v958, %v937
    %v963 = vmul.f32 %v958, %v938
    %v964 = vmul.f32 %v958, %v939
    %v965 = vmul.f32 %v958, %v940
    %973 = vrot.lane.b32.xlu0 %v959, 79
    %v974 = vpop.permute.xlu0 %973
    %975 = vrot.lane.b32.xlu0 %v960, 79
    %v976 = vpop.permute.xlu0 %975
    %977 = vrot.lane.b32.xlu0 %v961, 79
    %v978 = vpop.permute.xlu0 %977
    %979 = vrot.lane.b32.xlu0 %v962, 79
    %v980 = vpop.permute.xlu0 %979
    %981 = vrot.lane.b32.xlu0 %v963, 79
    %v982 = vpop.permute.xlu0 %981
    %983 = vrot.lane.b32.xlu0 %v964, 79
    %v984 = vpop.permute.xlu0 %983
    %985 = vrot.lane.b32.xlu0 %v965, 79
    %v986 = vpop.permute.xlu0 %985
    %v994 = vadd.f32 %v950, %v974
    %v995 = vadd.f32 %v951, %v976
    %v996 = vadd.f32 %v952, %v978
    %v997 = vadd.f32 %v953, %v980
    %v998 = vadd.f32 %v954, %v982
    %v999 = vadd.f32 %v955, %v984
    %v1000 = vadd.f32 %v956, %v986
    %s1001 = scalar_lea.vmem %s1, 784
    %v1002 = vld [vmem:[%s1001] sm:$0xff]
    %v1003 = vld [vmem:[%s1001 + $0x8] sm:$0xff]
    %v1004 = vld [vmem:[%s1001 + $0x10] sm:$0xff]
    %v1005 = vld [vmem:[%s1001 + $0x18] sm:$0xff]
    %v1006 = vld [vmem:[%s1001 + $0x20] sm:$0xff]
    %v1007 = vld [vmem:[%s1001 + $0x28] sm:$0xff]
    %v1008 = vld [vmem:[%s1001 + $0x30] sm:$0x1]
    %s1009 = sld [smem:[#allocation2 + $0x1c]]
    %v1010 = vstv %s1009
    %v1011 = vmul.f32 %v1010, %v1002
    %v1012 = vmul.f32 %v1010, %v1003
    %v1013 = vmul.f32 %v1010, %v1004
    %v1014 = vmul.f32 %v1010, %v1005
    %v1015 = vmul.f32 %v1010, %v1006
    %v1016 = vmul.f32 %v1010, %v1007
    %v1017 = vmul.f32 %v1010, %v1008
    %v1018 = vadd.f32 %v994, %v1011
    %v1019 = vadd.f32 %v995, %v1012
    %v1020 = vadd.f32 %v996, %v1013
    %v1021 = vadd.f32 %v997, %v1014
    %v1022 = vadd.f32 %v998, %v1015
    %v1023 = vadd.f32 %v999, %v1016
    %v1024 = vadd.f32 %v1000, %v1017
    %s1025 = sld [smem:[#allocation2 + $0x1d]]
    %v1026 = vstv %s1025
    %v1027 = vmul.f32 %v1026, %v1002
    %v1028 = vmul.f32 %v1026, %v1003
    %v1029 = vmul.f32 %v1026, %v1004
    %v1030 = vmul.f32 %v1026, %v1005
    %v1031 = vmul.f32 %v1026, %v1006
    %v1032 = vmul.f32 %v1026, %v1007
    %v1033 = vmul.f32 %v1026, %v1008
    %1041 = vrot.lane.b32.xlu0 %v1027, 79
    %v1042 = vpop.permute.xlu0 %1041
    %1043 = vrot.lane.b32.xlu0 %v1028, 79
    %v1044 = vpop.permute.xlu0 %1043
    %1045 = vrot.lane.b32.xlu0 %v1029, 79
    %v1046 = vpop.permute.xlu0 %1045
    %1047 = vrot.lane.b32.xlu0 %v1030, 79
    %v1048 = vpop.permute.xlu0 %1047
    %1049 = vrot.lane.b32.xlu0 %v1031, 79
    %v1050 = vpop.permute.xlu0 %1049
    %1051 = vrot.lane.b32.xlu0 %v1032, 79
    %v1052 = vpop.permute.xlu0 %1051
    %1053 = vrot.lane.b32.xlu0 %v1033, 79
    %v1054 = vpop.permute.xlu0 %1053
    %v1062 = vadd.f32 %v1018, %v1042
    %v1063 = vadd.f32 %v1019, %v1044
    %v1064 = vadd.f32 %v1020, %v1046
    %v1065 = vadd.f32 %v1021, %v1048
    %v1066 = vadd.f32 %v1022, %v1050
    %v1067 = vadd.f32 %v1023, %v1052
    %v1068 = vadd.f32 %v1024, %v1054
    %s1069 = scalar_lea.vmem %s1, 840
    %v1070 = vld [vmem:[%s1069] sm:$0xff]
    %v1071 = vld [vmem:[%s1069 + $0x8] sm:$0xff]
    %v1072 = vld [vmem:[%s1069 + $0x10] sm:$0xff]
    %v1073 = vld [vmem:[%s1069 + $0x18] sm:$0xff]
    %v1074 = vld [vmem:[%s1069 + $0x20] sm:$0xff]
    %v1075 = vld [vmem:[%s1069 + $0x28] sm:$0xff]
    %v1076 = vld [vmem:[%s1069 + $0x30] sm:$0x1]
    %s1077 = sld [smem:[#allocation2 + $0x1e]]
    %v1078 = vstv %s1077
    %v1079 = vmul.f32 %v1078, %v1070
    %v1080 = vmul.f32 %v1078, %v1071
    %v1081 = vmul.f32 %v1078, %v1072
    %v1082 = vmul.f32 %v1078, %v1073
    %v1083 = vmul.f32 %v1078, %v1074
    %v1084 = vmul.f32 %v1078, %v1075
    %v1085 = vmul.f32 %v1078, %v1076
    %v1086 = vadd.f32 %v1062, %v1079
    %v1087 = vadd.f32 %v1063, %v1080
    %v1088 = vadd.f32 %v1064, %v1081
    %v1089 = vadd.f32 %v1065, %v1082
    %v1090 = vadd.f32 %v1066, %v1083
    %v1091 = vadd.f32 %v1067, %v1084
    %v1092 = vadd.f32 %v1068, %v1085
    %s1093 = sld [smem:[#allocation2 + $0x1f]]
    %v1094 = vstv %s1093
    %v1095 = vmul.f32 %v1094, %v1070
    %v1096 = vmul.f32 %v1094, %v1071
    %v1097 = vmul.f32 %v1094, %v1072
    %v1098 = vmul.f32 %v1094, %v1073
    %v1099 = vmul.f32 %v1094, %v1074
    %v1100 = vmul.f32 %v1094, %v1075
    %v1101 = vmul.f32 %v1094, %v1076
    %1109 = vrot.lane.b32.xlu0 %v1095, 79
    %v1110 = vpop.permute.xlu0 %1109
    %1111 = vrot.lane.b32.xlu0 %v1096, 79
    %v1112 = vpop.permute.xlu0 %1111
    %1113 = vrot.lane.b32.xlu0 %v1097, 79
    %v1114 = vpop.permute.xlu0 %1113
    %1115 = vrot.lane.b32.xlu0 %v1098, 79
    %v1116 = vpop.permute.xlu0 %1115
    %1117 = vrot.lane.b32.xlu0 %v1099, 79
    %v1118 = vpop.permute.xlu0 %1117
    %1119 = vrot.lane.b32.xlu0 %v1100, 79
    %v1120 = vpop.permute.xlu0 %1119
    %1121 = vrot.lane.b32.xlu0 %v1101, 79
    %v1122 = vpop.permute.xlu0 %1121
    %v1130 = vadd.f32 %v1086, %v1110
    %v1131 = vadd.f32 %v1087, %v1112
    %v1132 = vadd.f32 %v1088, %v1114
    %v1133 = vadd.f32 %v1089, %v1116
    %v1134 = vadd.f32 %v1090, %v1118
    %v1135 = vadd.f32 %v1091, %v1120
    %v1136 = vadd.f32 %v1092, %v1122
    %s1137 = scalar_lea.vmem %s1, 896
    %v1138 = vld [vmem:[%s1137] sm:$0xff]
    %v1139 = vld [vmem:[%s1137 + $0x8] sm:$0xff]
    %v1140 = vld [vmem:[%s1137 + $0x10] sm:$0xff]
    %v1141 = vld [vmem:[%s1137 + $0x18] sm:$0xff]
    %v1142 = vld [vmem:[%s1137 + $0x20] sm:$0xff]
    %v1143 = vld [vmem:[%s1137 + $0x28] sm:$0xff]
    %v1144 = vld [vmem:[%s1137 + $0x30] sm:$0x1]
    %s1145 = sld [smem:[#allocation2 + $0x20]]
    %v1146 = vstv %s1145
    %v1147 = vmul.f32 %v1146, %v1138
    %v1148 = vmul.f32 %v1146, %v1139
    %v1149 = vmul.f32 %v1146, %v1140
    %v1150 = vmul.f32 %v1146, %v1141
    %v1151 = vmul.f32 %v1146, %v1142
    %v1152 = vmul.f32 %v1146, %v1143
    %v1153 = vmul.f32 %v1146, %v1144
    %v1154 = vadd.f32 %v1130, %v1147
    %v1155 = vadd.f32 %v1131, %v1148
    %v1156 = vadd.f32 %v1132, %v1149
    %v1157 = vadd.f32 %v1133, %v1150
    %v1158 = vadd.f32 %v1134, %v1151
    %v1159 = vadd.f32 %v1135, %v1152
    %v1160 = vadd.f32 %v1136, %v1153
    %s1161 = sld [smem:[#allocation2 + $0x21]]
    %v1162 = vstv %s1161
    %v1163 = vmul.f32 %v1162, %v1138
    %v1164 = vmul.f32 %v1162, %v1139
    %v1165 = vmul.f32 %v1162, %v1140
    %v1166 = vmul.f32 %v1162, %v1141
    %v1167 = vmul.f32 %v1162, %v1142
    %v1168 = vmul.f32 %v1162, %v1143
    %v1169 = vmul.f32 %v1162, %v1144
    %1177 = vrot.lane.b32.xlu0 %v1163, 79
    %v1178 = vpop.permute.xlu0 %1177
    %1179 = vrot.lane.b32.xlu0 %v1164, 79
    %v1180 = vpop.permute.xlu0 %1179
    %1181 = vrot.lane.b32.xlu0 %v1165, 79
    %v1182 = vpop.permute.xlu0 %1181
    %1183 = vrot.lane.b32.xlu0 %v1166, 79
    %v1184 = vpop.permute.xlu0 %1183
    %1185 = vrot.lane.b32.xlu0 %v1167, 79
    %v1186 = vpop.permute.xlu0 %1185
    %1187 = vrot.lane.b32.xlu0 %v1168, 79
    %v1188 = vpop.permute.xlu0 %1187
    %1189 = vrot.lane.b32.xlu0 %v1169, 79
    %v1190 = vpop.permute.xlu0 %1189
    %v1198 = vadd.f32 %v1154, %v1178
    %v1199 = vadd.f32 %v1155, %v1180
    %v1200 = vadd.f32 %v1156, %v1182
    %v1201 = vadd.f32 %v1157, %v1184
    %v1202 = vadd.f32 %v1158, %v1186
    %v1203 = vadd.f32 %v1159, %v1188
    %v1204 = vadd.f32 %v1160, %v1190
    %s1205 = scalar_lea.vmem %s1, 952
    %v1206 = vld [vmem:[%s1205] sm:$0xff]
    %v1207 = vld [vmem:[%s1205 + $0x8] sm:$0xff]
    %v1208 = vld [vmem:[%s1205 + $0x10] sm:$0xff]
    %v1209 = vld [vmem:[%s1205 + $0x18] sm:$0xff]
    %v1210 = vld [vmem:[%s1205 + $0x20] sm:$0xff]
    %v1211 = vld [vmem:[%s1205 + $0x28] sm:$0xff]
    %v1212 = vld [vmem:[%s1205 + $0x30] sm:$0x1]
    %s1213 = sld [smem:[#allocation2 + $0x22]]
    %v1214 = vstv %s1213
    %v1215 = vmul.f32 %v1214, %v1206
    %v1216 = vmul.f32 %v1214, %v1207
    %v1217 = vmul.f32 %v1214, %v1208
    %v1218 = vmul.f32 %v1214, %v1209
    %v1219 = vmul.f32 %v1214, %v1210
    %v1220 = vmul.f32 %v1214, %v1211
    %v1221 = vmul.f32 %v1214, %v1212
    %v1222 = vadd.f32 %v1198, %v1215
    %v1223 = vadd.f32 %v1199, %v1216
    %v1224 = vadd.f32 %v1200, %v1217
    %v1225 = vadd.f32 %v1201, %v1218
    %v1226 = vadd.f32 %v1202, %v1219
    %v1227 = vadd.f32 %v1203, %v1220
    %v1228 = vadd.f32 %v1204, %v1221
    %s1229 = sld [smem:[#allocation2 + $0x23]]
    %v1230 = vstv %s1229
    %v1231 = vmul.f32 %v1230, %v1206
    %v1232 = vmul.f32 %v1230, %v1207
    %v1233 = vmul.f32 %v1230, %v1208
    %v1234 = vmul.f32 %v1230, %v1209
    %v1235 = vmul.f32 %v1230, %v1210
    %v1236 = vmul.f32 %v1230, %v1211
    %v1237 = vmul.f32 %v1230, %v1212
    %1245 = vrot.lane.b32.xlu0 %v1231, 79
    %v1246 = vpop.permute.xlu0 %1245
    %1247 = vrot.lane.b32.xlu0 %v1232, 79
    %v1248 = vpop.permute.xlu0 %1247
    %1249 = vrot.lane.b32.xlu0 %v1233, 79
    %v1250 = vpop.permute.xlu0 %1249
    %1251 = vrot.lane.b32.xlu0 %v1234, 79
    %v1252 = vpop.permute.xlu0 %1251
    %1253 = vrot.lane.b32.xlu0 %v1235, 79
    %v1254 = vpop.permute.xlu0 %1253
    %1255 = vrot.lane.b32.xlu0 %v1236, 79
    %v1256 = vpop.permute.xlu0 %1255
    %1257 = vrot.lane.b32.xlu0 %v1237, 79
    %v1258 = vpop.permute.xlu0 %1257
    %v1266 = vadd.f32 %v1222, %v1246
    %v1267 = vadd.f32 %v1223, %v1248
    %v1268 = vadd.f32 %v1224, %v1250
    %v1269 = vadd.f32 %v1225, %v1252
    %v1270 = vadd.f32 %v1226, %v1254
    %v1271 = vadd.f32 %v1227, %v1256
    %v1272 = vadd.f32 %v1228, %v1258
    %s1273 = scalar_lea.vmem %s1, 1008
    %v1274 = vld [vmem:[%s1273] sm:$0xff]
    %v1275 = vld [vmem:[%s1273 + $0x8] sm:$0xff]
    %v1276 = vld [vmem:[%s1273 + $0x10] sm:$0xff]
    %v1277 = vld [vmem:[%s1273 + $0x18] sm:$0xff]
    %v1278 = vld [vmem:[%s1273 + $0x20] sm:$0xff]
    %v1279 = vld [vmem:[%s1273 + $0x28] sm:$0xff]
    %v1280 = vld [vmem:[%s1273 + $0x30] sm:$0x1]
    %s1281 = sld [smem:[#allocation2 + $0x24]]
    %v1282 = vstv %s1281
    %v1283 = vmul.f32 %v1282, %v1274
    %v1284 = vmul.f32 %v1282, %v1275
    %v1285 = vmul.f32 %v1282, %v1276
    %v1286 = vmul.f32 %v1282, %v1277
    %v1287 = vmul.f32 %v1282, %v1278
    %v1288 = vmul.f32 %v1282, %v1279
    %v1289 = vmul.f32 %v1282, %v1280
    %v1290 = vadd.f32 %v1266, %v1283
    %v1291 = vadd.f32 %v1267, %v1284
    %v1292 = vadd.f32 %v1268, %v1285
    %v1293 = vadd.f32 %v1269, %v1286
    %v1294 = vadd.f32 %v1270, %v1287
    %v1295 = vadd.f32 %v1271, %v1288
    %v1296 = vadd.f32 %v1272, %v1289
    %s1297 = sld [smem:[#allocation2 + $0x25]]
    %v1298 = vstv %s1297
    %v1299 = vmul.f32 %v1298, %v1274
    %v1300 = vmul.f32 %v1298, %v1275
    %v1301 = vmul.f32 %v1298, %v1276
    %v1302 = vmul.f32 %v1298, %v1277
    %v1303 = vmul.f32 %v1298, %v1278
    %v1304 = vmul.f32 %v1298, %v1279
    %v1305 = vmul.f32 %v1298, %v1280
    %1313 = vrot.lane.b32.xlu0 %v1299, 79
    %v1314 = vpop.permute.xlu0 %1313
    %1315 = vrot.lane.b32.xlu0 %v1300, 79
    %v1316 = vpop.permute.xlu0 %1315
    %1317 = vrot.lane.b32.xlu0 %v1301, 79
    %v1318 = vpop.permute.xlu0 %1317
    %1319 = vrot.lane.b32.xlu0 %v1302, 79
    %v1320 = vpop.permute.xlu0 %1319
    %1321 = vrot.lane.b32.xlu0 %v1303, 79
    %v1322 = vpop.permute.xlu0 %1321
    %1323 = vrot.lane.b32.xlu0 %v1304, 79
    %v1324 = vpop.permute.xlu0 %1323
    %1325 = vrot.lane.b32.xlu0 %v1305, 79
    %v1326 = vpop.permute.xlu0 %1325
    %v1334 = vadd.f32 %v1290, %v1314
    %v1335 = vadd.f32 %v1291, %v1316
    %v1336 = vadd.f32 %v1292, %v1318
    %v1337 = vadd.f32 %v1293, %v1320
    %v1338 = vadd.f32 %v1294, %v1322
    %v1339 = vadd.f32 %v1295, %v1324
    %v1340 = vadd.f32 %v1296, %v1326
    %s1341 = scalar_lea.vmem %s1, 1064
    %v1342 = vld [vmem:[%s1341] sm:$0xff]
    %v1343 = vld [vmem:[%s1341 + $0x8] sm:$0xff]
    %v1344 = vld [vmem:[%s1341 + $0x10] sm:$0xff]
    %v1345 = vld [vmem:[%s1341 + $0x18] sm:$0xff]
    %v1346 = vld [vmem:[%s1341 + $0x20] sm:$0xff]
    %v1347 = vld [vmem:[%s1341 + $0x28] sm:$0xff]
    %v1348 = vld [vmem:[%s1341 + $0x30] sm:$0x1]
    %s1349 = sld [smem:[#allocation2 + $0x26]]
    %v1350 = vstv %s1349
    %v1351 = vmul.f32 %v1350, %v1342
    %v1352 = vmul.f32 %v1350, %v1343
    %v1353 = vmul.f32 %v1350, %v1344
    %v1354 = vmul.f32 %v1350, %v1345
    %v1355 = vmul.f32 %v1350, %v1346
    %v1356 = vmul.f32 %v1350, %v1347
    %v1357 = vmul.f32 %v1350, %v1348
    %v1358 = vadd.f32 %v1334, %v1351
    %v1359 = vadd.f32 %v1335, %v1352
    %v1360 = vadd.f32 %v1336, %v1353
    %v1361 = vadd.f32 %v1337, %v1354
    %v1362 = vadd.f32 %v1338, %v1355
    %v1363 = vadd.f32 %v1339, %v1356
    %v1364 = vadd.f32 %v1340, %v1357
    %s1365 = sld [smem:[#allocation2 + $0x27]]
    %v1366 = vstv %s1365
    %v1367 = vmul.f32 %v1366, %v1342
    %v1368 = vmul.f32 %v1366, %v1343
    %v1369 = vmul.f32 %v1366, %v1344
    %v1370 = vmul.f32 %v1366, %v1345
    %v1371 = vmul.f32 %v1366, %v1346
    %v1372 = vmul.f32 %v1366, %v1347
    %v1373 = vmul.f32 %v1366, %v1348
    %1381 = vrot.lane.b32.xlu0 %v1367, 79
    %v1382 = vpop.permute.xlu0 %1381
    %1383 = vrot.lane.b32.xlu0 %v1368, 79
    %v1384 = vpop.permute.xlu0 %1383
    %1385 = vrot.lane.b32.xlu0 %v1369, 79
    %v1386 = vpop.permute.xlu0 %1385
    %1387 = vrot.lane.b32.xlu0 %v1370, 79
    %v1388 = vpop.permute.xlu0 %1387
    %1389 = vrot.lane.b32.xlu0 %v1371, 79
    %v1390 = vpop.permute.xlu0 %1389
    %1391 = vrot.lane.b32.xlu0 %v1372, 79
    %v1392 = vpop.permute.xlu0 %1391
    %1393 = vrot.lane.b32.xlu0 %v1373, 79
    %v1394 = vpop.permute.xlu0 %1393
    %v1402 = vadd.f32 %v1358, %v1382
    %v1403 = vadd.f32 %v1359, %v1384
    %v1404 = vadd.f32 %v1360, %v1386
    %v1405 = vadd.f32 %v1361, %v1388
    %v1406 = vadd.f32 %v1362, %v1390
    %v1407 = vadd.f32 %v1363, %v1392
    %v1408 = vadd.f32 %v1364, %v1394
    %s1409 = scalar_lea.vmem %s1, 1120
    %v1410 = vld [vmem:[%s1409] sm:$0xff]
    %v1411 = vld [vmem:[%s1409 + $0x8] sm:$0xff]
    %v1412 = vld [vmem:[%s1409 + $0x10] sm:$0xff]
    %v1413 = vld [vmem:[%s1409 + $0x18] sm:$0xff]
    %v1414 = vld [vmem:[%s1409 + $0x20] sm:$0xff]
    %v1415 = vld [vmem:[%s1409 + $0x28] sm:$0xff]
    %v1416 = vld [vmem:[%s1409 + $0x30] sm:$0x1]
    %s1417 = sld [smem:[#allocation2 + $0x28]]
    %v1418 = vstv %s1417
    %v1419 = vmul.f32 %v1418, %v1410
    %v1420 = vmul.f32 %v1418, %v1411
    %v1421 = vmul.f32 %v1418, %v1412
    %v1422 = vmul.f32 %v1418, %v1413
    %v1423 = vmul.f32 %v1418, %v1414
    %v1424 = vmul.f32 %v1418, %v1415
    %v1425 = vmul.f32 %v1418, %v1416
    %v1426 = vadd.f32 %v1402, %v1419
    %v1427 = vadd.f32 %v1403, %v1420
    %v1428 = vadd.f32 %v1404, %v1421
    %v1429 = vadd.f32 %v1405, %v1422
    %v1430 = vadd.f32 %v1406, %v1423
    %v1431 = vadd.f32 %v1407, %v1424
    %v1432 = vadd.f32 %v1408, %v1425
    %s1433 = sld [smem:[#allocation2 + $0x29]]
    %v1434 = vstv %s1433
    %v1435 = vmul.f32 %v1434, %v1410
    %v1436 = vmul.f32 %v1434, %v1411
    %v1437 = vmul.f32 %v1434, %v1412
    %v1438 = vmul.f32 %v1434, %v1413
    %v1439 = vmul.f32 %v1434, %v1414
    %v1440 = vmul.f32 %v1434, %v1415
    %v1441 = vmul.f32 %v1434, %v1416
    %1449 = vrot.lane.b32.xlu0 %v1435, 79
    %v1450 = vpop.permute.xlu0 %1449
    %1451 = vrot.lane.b32.xlu0 %v1436, 79
    %v1452 = vpop.permute.xlu0 %1451
    %1453 = vrot.lane.b32.xlu0 %v1437, 79
    %v1454 = vpop.permute.xlu0 %1453
    %1455 = vrot.lane.b32.xlu0 %v1438, 79
    %v1456 = vpop.permute.xlu0 %1455
    %1457 = vrot.lane.b32.xlu0 %v1439, 79
    %v1458 = vpop.permute.xlu0 %1457
    %1459 = vrot.lane.b32.xlu0 %v1440, 79
    %v1460 = vpop.permute.xlu0 %1459
    %1461 = vrot.lane.b32.xlu0 %v1441, 79
    %v1462 = vpop.permute.xlu0 %1461
    %v1470 = vadd.f32 %v1426, %v1450
    %v1471 = vadd.f32 %v1427, %v1452
    %v1472 = vadd.f32 %v1428, %v1454
    %v1473 = vadd.f32 %v1429, %v1456
    %v1474 = vadd.f32 %v1430, %v1458
    %v1475 = vadd.f32 %v1431, %v1460
    %v1476 = vadd.f32 %v1432, %v1462
    %s1477 = scalar_lea.vmem %s1, 1176
    %v1478 = vld [vmem:[%s1477] sm:$0xff]
    %v1479 = vld [vmem:[%s1477 + $0x8] sm:$0xff]
    %v1480 = vld [vmem:[%s1477 + $0x10] sm:$0xff]
    %v1481 = vld [vmem:[%s1477 + $0x18] sm:$0xff]
    %v1482 = vld [vmem:[%s1477 + $0x20] sm:$0xff]
    %v1483 = vld [vmem:[%s1477 + $0x28] sm:$0xff]
    %v1484 = vld [vmem:[%s1477 + $0x30] sm:$0x1]
    %s1485 = sld [smem:[#allocation2 + $0x2a]]
    %v1486 = vstv %s1485
    %v1487 = vmul.f32 %v1486, %v1478
    %v1488 = vmul.f32 %v1486, %v1479
    %v1489 = vmul.f32 %v1486, %v1480
    %v1490 = vmul.f32 %v1486, %v1481
    %v1491 = vmul.f32 %v1486, %v1482
    %v1492 = vmul.f32 %v1486, %v1483
    %v1493 = vmul.f32 %v1486, %v1484
    %v1494 = vadd.f32 %v1470, %v1487
    %v1495 = vadd.f32 %v1471, %v1488
    %v1496 = vadd.f32 %v1472, %v1489
    %v1497 = vadd.f32 %v1473, %v1490
    %v1498 = vadd.f32 %v1474, %v1491
    %v1499 = vadd.f32 %v1475, %v1492
    %v1500 = vadd.f32 %v1476, %v1493
    %s1501 = sld [smem:[#allocation2 + $0x2b]]
    %v1502 = vstv %s1501
    %v1503 = vmul.f32 %v1502, %v1478
    %v1504 = vmul.f32 %v1502, %v1479
    %v1505 = vmul.f32 %v1502, %v1480
    %v1506 = vmul.f32 %v1502, %v1481
    %v1507 = vmul.f32 %v1502, %v1482
    %v1508 = vmul.f32 %v1502, %v1483
    %v1509 = vmul.f32 %v1502, %v1484
    %1517 = vrot.lane.b32.xlu0 %v1503, 79
    %v1518 = vpop.permute.xlu0 %1517
    %1519 = vrot.lane.b32.xlu0 %v1504, 79
    %v1520 = vpop.permute.xlu0 %1519
    %1521 = vrot.lane.b32.xlu0 %v1505, 79
    %v1522 = vpop.permute.xlu0 %1521
    %1523 = vrot.lane.b32.xlu0 %v1506, 79
    %v1524 = vpop.permute.xlu0 %1523
    %1525 = vrot.lane.b32.xlu0 %v1507, 79
    %v1526 = vpop.permute.xlu0 %1525
    %1527 = vrot.lane.b32.xlu0 %v1508, 79
    %v1528 = vpop.permute.xlu0 %1527
    %1529 = vrot.lane.b32.xlu0 %v1509, 79
    %v1530 = vpop.permute.xlu0 %1529
    %v1538 = vadd.f32 %v1494, %v1518
    %v1539 = vadd.f32 %v1495, %v1520
    %v1540 = vadd.f32 %v1496, %v1522
    %v1541 = vadd.f32 %v1497, %v1524
    %v1542 = vadd.f32 %v1498, %v1526
    %v1543 = vadd.f32 %v1499, %v1528
    %v1544 = vadd.f32 %v1500, %v1530
    %s1545 = scalar_lea.vmem %s1, 1232
    %v1546 = vld [vmem:[%s1545] sm:$0xff]
    %v1547 = vld [vmem:[%s1545 + $0x8] sm:$0xff]
    %v1548 = vld [vmem:[%s1545 + $0x10] sm:$0xff]
    %v1549 = vld [vmem:[%s1545 + $0x18] sm:$0xff]
    %v1550 = vld [vmem:[%s1545 + $0x20] sm:$0xff]
    %v1551 = vld [vmem:[%s1545 + $0x28] sm:$0xff]
    %v1552 = vld [vmem:[%s1545 + $0x30] sm:$0x1]
    %s1553 = sld [smem:[#allocation2 + $0x2c]]
    %v1554 = vstv %s1553
    %v1555 = vmul.f32 %v1554, %v1546
    %v1556 = vmul.f32 %v1554, %v1547
    %v1557 = vmul.f32 %v1554, %v1548
    %v1558 = vmul.f32 %v1554, %v1549
    %v1559 = vmul.f32 %v1554, %v1550
    %v1560 = vmul.f32 %v1554, %v1551
    %v1561 = vmul.f32 %v1554, %v1552
    %v1562 = vadd.f32 %v1538, %v1555
    %v1563 = vadd.f32 %v1539, %v1556
    %v1564 = vadd.f32 %v1540, %v1557
    %v1565 = vadd.f32 %v1541, %v1558
    %v1566 = vadd.f32 %v1542, %v1559
    %v1567 = vadd.f32 %v1543, %v1560
    %v1568 = vadd.f32 %v1544, %v1561
    %s1569 = sld [smem:[#allocation2 + $0x2d]]
    %v1570 = vstv %s1569
    %v1571 = vmul.f32 %v1570, %v1546
    %v1572 = vmul.f32 %v1570, %v1547
    %v1573 = vmul.f32 %v1570, %v1548
    %v1574 = vmul.f32 %v1570, %v1549
    %v1575 = vmul.f32 %v1570, %v1550
    %v1576 = vmul.f32 %v1570, %v1551
    %v1577 = vmul.f32 %v1570, %v1552
    %1585 = vrot.lane.b32.xlu0 %v1571, 79
    %v1586 = vpop.permute.xlu0 %1585
    %1587 = vrot.lane.b32.xlu0 %v1572, 79
    %v1588 = vpop.permute.xlu0 %1587
    %1589 = vrot.lane.b32.xlu0 %v1573, 79
    %v1590 = vpop.permute.xlu0 %1589
    %1591 = vrot.lane.b32.xlu0 %v1574, 79
    %v1592 = vpop.permute.xlu0 %1591
    %1593 = vrot.lane.b32.xlu0 %v1575, 79
    %v1594 = vpop.permute.xlu0 %1593
    %1595 = vrot.lane.b32.xlu0 %v1576, 79
    %v1596 = vpop.permute.xlu0 %1595
    %1597 = vrot.lane.b32.xlu0 %v1577, 79
    %v1598 = vpop.permute.xlu0 %1597
    %v1606 = vadd.f32 %v1562, %v1586
    %v1607 = vadd.f32 %v1563, %v1588
    %v1608 = vadd.f32 %v1564, %v1590
    %v1609 = vadd.f32 %v1565, %v1592
    %v1610 = vadd.f32 %v1566, %v1594
    %v1611 = vadd.f32 %v1567, %v1596
    %v1612 = vadd.f32 %v1568, %v1598
    %s1613 = sld [smem:[#allocation2 + $0x2e]]
    %s1614 = scalar_lea.vmem %s1, 1288
    %v1615 = vld [vmem:[%s1614] sm:$0xff]
    %v1616 = vld [vmem:[%s1614 + $0x8] sm:$0xff]
    %v1617 = vld [vmem:[%s1614 + $0x10] sm:$0xff]
    %v1618 = vld [vmem:[%s1614 + $0x18] sm:$0xff]
    %v1619 = vld [vmem:[%s1614 + $0x20] sm:$0xff]
    %v1620 = vld [vmem:[%s1614 + $0x28] sm:$0xff]
    %v1621 = vld [vmem:[%s1614 + $0x30] sm:$0x1]
    %v1622 = vstv %s1613
    %v1623 = vmul.f32 %v1622, %v1615
    %v1624 = vmul.f32 %v1622, %v1616
    %v1625 = vmul.f32 %v1622, %v1617
    %v1626 = vmul.f32 %v1622, %v1618
    %v1627 = vmul.f32 %v1622, %v1619
    %v1628 = vmul.f32 %v1622, %v1620
    %v1629 = vmul.f32 %v1622, %v1621
    %v1630 = vadd.f32 %v1606, %v1623
    %v1631 = vadd.f32 %v1607, %v1624
    %v1632 = vadd.f32 %v1608, %v1625
    %v1633 = vadd.f32 %v1609, %v1626
    %v1634 = vadd.f32 %v1610, %v1627
    %v1635 = vadd.f32 %v1611, %v1628
    %v1636 = vadd.f32 %v1612, %v1629
    %s1637 = sld [smem:[#allocation5]]
    %v1638 = vstv %s1637
    %v1639 = vmul.f32 %v1638, %v1630
    %v1640 = vmul.f32 %v1638, %v1631
    %v1641 = vmul.f32 %v1638, %v1632
    %v1642 = vmul.f32 %v1638, %v1633
    %v1643 = vmul.f32 %v1638, %v1634
    %v1644 = vmul.f32 %v1638, %v1635
    %s1645 = sld [smem:[#allocation5 + $0x1]]
    %v1646 = vstv %s1645
    %v1647 = vmul.f32 %v1646, %v1630
    %v1648 = vmul.f32 %v1646, %v1631
    %v1649 = vmul.f32 %v1646, %v1632
    %v1650 = vmul.f32 %v1646, %v1633
    %v1651 = vmul.f32 %v1646, %v1634
    %v1652 = vmul.f32 %v1646, %v1635
    %1659 = vrot.lane.b32.xlu0 %v1647, 127
    %v1660 = vpop.permute.xlu0 %1659
    %1661 = vrot.lane.b32.xlu0 %v1648, 127
    %v1662 = vpop.permute.xlu0 %1661
    %1663 = vrot.lane.b32.xlu0 %v1649, 127
    %v1664 = vpop.permute.xlu0 %1663
    %1665 = vrot.lane.b32.xlu0 %v1650, 127
    %v1666 = vpop.permute.xlu0 %1665
    %1667 = vrot.lane.b32.xlu0 %v1651, 127
    %v1668 = vpop.permute.xlu0 %1667
    %1669 = vrot.lane.b32.xlu0 %v1652, 127
    %v1670 = vpop.permute.xlu0 %1669
    %v1677 = vadd.f32 %v1639, %v1660
    %v1678 = vadd.f32 %v1640, %v1662
    %v1679 = vadd.f32 %v1641, %v1664
    %v1680 = vadd.f32 %v1642, %v1666
    %v1681 = vadd.f32 %v1643, %v1668
    %v1682 = vadd.f32 %v1644, %v1670
    %s1683 = sld [smem:[#allocation5 + $0x2]]
    %v1684 = vstv %s1683
    %v1685 = vmul.f32 %v1684, %v1630
    %v1686 = vmul.f32 %v1684, %v1631
    %v1687 = vmul.f32 %v1684, %v1632
    %v1688 = vmul.f32 %v1684, %v1633
    %v1689 = vmul.f32 %v1684, %v1634
    %v1690 = vmul.f32 %v1684, %v1635
    %v1691 = vmul.f32 %v1684, %v1636
    %vm1699 = vcmask 1046528
    %v1700 = vrot.slane %v1685, 1
    %v1701 = vrot.slane %v1686, 1
    %v1702 = vsel %vm1699, %v1700, %v1701
    %v1703 = vrot.slane %v1687, 1
    %v1704 = vsel %vm1699, %v1701, %v1703
    %v1705 = vrot.slane %v1688, 1
    %v1706 = vsel %vm1699, %v1703, %v1705
    %v1707 = vrot.slane %v1689, 1
    %v1708 = vsel %vm1699, %v1705, %v1707
    %v1709 = vrot.slane %v1690, 1
    %v1710 = vsel %vm1699, %v1707, %v1709
    %v1711 = vrot.slane %v1691, 1
    %v1712 = vsel %vm1699, %v1709, %v1711
    %v1719 = vadd.f32 %v1677, %v1702
    %v1720 = vadd.f32 %v1678, %v1704
    %v1721 = vadd.f32 %v1679, %v1706
    %v1722 = vadd.f32 %v1680, %v1708
    %v1723 = vadd.f32 %v1681, %v1710
    %v1724 = vadd.f32 %v1682, %v1712
    %s1725 = sld [smem:[#allocation5 + $0x3]]
    %v1726 = vstv %s1725
    %v1727 = vmul.f32 %v1726, %v1630
    %v1728 = vmul.f32 %v1726, %v1631
    %v1729 = vmul.f32 %v1726, %v1632
    %v1730 = vmul.f32 %v1726, %v1633
    %v1731 = vmul.f32 %v1726, %v1634
    %v1732 = vmul.f32 %v1726, %v1635
    %v1733 = vmul.f32 %v1726, %v1636
    %v1741 = vrot.slane %v1727, 1
    %v1742 = vrot.slane %v1728, 1
    %v1743 = vsel %vm1699, %v1741, %v1742
    %v1744 = vrot.slane %v1729, 1
    %v1745 = vsel %vm1699, %v1742, %v1744
    %v1746 = vrot.slane %v1730, 1
    %v1747 = vsel %vm1699, %v1744, %v1746
    %v1748 = vrot.slane %v1731, 1
    %v1749 = vsel %vm1699, %v1746, %v1748
    %v1750 = vrot.slane %v1732, 1
    %v1751 = vsel %vm1699, %v1748, %v1750
    %v1752 = vrot.slane %v1733, 1
    %v1753 = vsel %vm1699, %v1750, %v1752
    %1754 = vrot.lane.b32.xlu0 %v1743, 127
    %v1755 = vpop.permute.xlu0 %1754
    %1756 = vrot.lane.b32.xlu0 %v1745, 127
    %v1757 = vpop.permute.xlu0 %1756
    %1758 = vrot.lane.b32.xlu0 %v1747, 127
    %v1759 = vpop.permute.xlu0 %1758
    %1760 = vrot.lane.b32.xlu0 %v1749, 127
    %v1761 = vpop.permute.xlu0 %1760
    %1762 = vrot.lane.b32.xlu0 %v1751, 127
    %v1763 = vpop.permute.xlu0 %1762
    %1764 = vrot.lane.b32.xlu0 %v1753, 127
    %v1765 = vpop.permute.xlu0 %1764
    %v1772 = vadd.f32 %v1719, %v1755
    %v1773 = vadd.f32 %v1720, %v1757
    %v1774 = vadd.f32 %v1721, %v1759
    %v1775 = vadd.f32 %v1722, %v1761
    %v1776 = vadd.f32 %v1723, %v1763
    %v1777 = vadd.f32 %v1724, %v1765
    %s1778 = sld [smem:[#allocation5 + $0x4]]
    %v1779 = vstv %s1778
    %v1780 = vadd.f32 %v1772, %v1779
    %v1781 = vadd.f32 %v1773, %v1779
    %v1782 = vadd.f32 %v1774, %v1779
    %v1783 = vadd.f32 %v1775, %v1779
    %v1784 = vadd.f32 %v1776, %v1779
    %v1785 = vadd.f32 %v1777, %v1779
    %vm1786 = vcmask 392192
    %1787 = vst.msk [vmem:[#allocation7] sm:$0xff] %vm1786, %v1780
    %1788 = vst.msk [vmem:[#allocation7 + $0x8] sm:$0xff] %vm1786, %v1781
    %1789 = vst.msk [vmem:[#allocation7 + $0x10] sm:$0xff] %vm1786, %v1782
    %1790 = vst.msk [vmem:[#allocation7 + $0x18] sm:$0xff] %vm1786, %v1783
    %1791 = vst.msk [vmem:[#allocation7 + $0x20] sm:$0xff] %vm1786, %v1784
    %1792 = vst.msk [vmem:[#allocation7 + $0x28] sm:$0xff] %vm1786, %v1785
    // Predicated region
    $region26: #{net_forward.1} parent=1 // pred_check
      _
    $region27: #{net_forward.1} parent=1 // pred_check_branch
      %1794 = sbr.rel (0) target = $region29
    $region28: #{net_forward.1} parent=1 // pred_region
      %s1796 = ssub.s32 768, 768
      %1797 = vsyncadd [#allocation3], %s1796
      %s1798 = sshll.u32 [#allocation7], 4
      %s1799 = int_to_ptr.vmem [resolvable:$true] %s1798
      %1804 = dma.vmem_to_hbm [thread:$0]  %s1799, 768, %s4, [#allocation3], 128, 128, 8
    $region29: #{net_forward.1} parent=1 // pred_fallthru
      _
    // Predicated region
    $region30: #{net_forward.1} parent=1 // pred_check
      _
    $region31: #{net_forward.1} parent=1 // pred_check_branch
      %1806 = sbr.rel (0) target = $region33
    $region32: #{net_forward.1} parent=1 // pred_region
      %1807 = dma.done [#allocation3], 768
    $region33: #{net_forward.1} parent=1 // pred_fallthru
      _
    %1808 = vsyncpa [#allocation3], 1
    %1809 = vsyncpa [#allocation4], 1
    %1810 = vsyncpa [#allocation6], 1

</llo_original>
